<compile_context>
chip_gen: v7x
topology: tpu7x:2x2x1
jax: 0.10.0
libtpu: 0.0.40
codegen_flags: <defaults>
</compile_context>

<pallas_src>
import numpy as np
import jax
import jax.numpy as jnp
from jax import lax
from jax.experimental import pallas as pl
from jax.experimental.pallas import tpu as pltpu

K_D = 7            # conv kernel size (from the PyTorch module)
PAD = K_D // 2     # conv padding = 3
BN_EPS = 1e-5
NEG = -jnp.inf     # pad value for max-pool windows


def _elu(x):
    # nn.ELU(alpha=1.0).  exp() runs on the EUP slot (essentially free next to the matmuls).
    return jnp.where(x > 0, x, jnp.exp(jnp.minimum(x, 0.0)) - 1.0)


# --------------------------------------------------------------------------------------------
# Wrapper-side parameter unfolding (weights only; no input data touched).
# --------------------------------------------------------------------------------------------
def conv_to_matrix(w, h_in, w_in, stride, pad):
    """Unfold a 2-D conv with HWIO weights into a dense (Hin*Win*Ci, Ho*Wo*Co) matrix so that
    conv(x) == x.reshape(N, Hin*Win*Ci) @ M, with NHWC row-major flattening on both sides."""
    kh_d, kw_d, ci, co = w.shape
    h_out = (h_in + 2 * pad - kh_d) // stride + 1
    w_out = (w_in + 2 * pad - kw_d) // stride + 1
    rows, cols, khs, kws = [], [], [], []
    for oh in range(h_out):
        for ow in range(w_out):
            for kh in range(kh_d):
                ih = oh * stride + kh - pad
                if ih < 0 or ih >= h_in:
                    continue
                for kw in range(kw_d):
                    iw = ow * stride + kw - pad
                    if iw < 0 or iw >= w_in:
                        continue
                    rows.append(ih * w_in + iw)
                    cols.append(oh * w_out + ow)
                    khs.append(kh)
                    kws.append(kw)
    vals = w[np.asarray(khs), np.asarray(kws)]                      # (T, Ci, Co)
    m = jnp.zeros((h_in * w_in, h_out * w_out, ci, co), w.dtype)
    m = m.at[np.asarray(rows), np.asarray(cols)].set(vals)
    m = m.transpose(0, 2, 1, 3).reshape(h_in * w_in * ci, h_out * w_out * co)
    return m, (h_out, w_out)


def blockdiag_1x1(ws, n_pos):
    """1x1 conv weights (Ci, Co) -> block-diagonal (n_pos*Ci, n_pos*Co), position-major."""
    ci, co = ws.shape
    idx = np.arange(n_pos)
    m = jnp.zeros((n_pos, n_pos, ci, co), ws.dtype)
    m = m.at[idx, idx].set(jnp.broadcast_to(ws, (n_pos, ci, co)))
    return m.transpose(0, 2, 1, 3).reshape(n_pos * ci, n_pos * co)


def pool_taps(x_nhwc, h_out, w_out):
    """Gather the 49 taps of MaxPool(3,2,1) ∘ MaxPool(3,2,1) == MaxPool(7, stride 4, pad 3).
    Returns (49, N, Ho*Wo*C) with -inf at out-of-range taps (pure data movement)."""
    n, _, _, c = x_nhwc.shape
    xp = jnp.pad(x_nhwc, ((0, 0), (3, 3), (3, 3), (0, 0)), constant_values=NEG)
    taps = [xp[:, th:th + 4 * (h_out - 1) + 1:4, tw:tw + 4 * (w_out - 1) + 1:4, :]
            for th in range(7) for tw in range(7)]
    return jnp.stack(taps, axis=0).reshape(49, n, h_out * w_out * c)


# --------------------------------------------------------------------------------------------
# Pallas kernel: three MXU matmuls + one max-reduction + f32 elementwise.  No reshapes,
# no strided gathers, no padded scratch; lane-dense (N, H2*W2*Cout) output store.
# --------------------------------------------------------------------------------------------
def resblock_kernel(x_ref, w1_ref, b1_ref, s1_ref, t1_ref,
                    w2_ref, b2_ref, s2_ref, t2_ref,
                    pool_ref, ws_ref, o_ref):
    # conv path : ConvBlock #1  (one bf16 MXU contraction, f32 accumulation)
    h1 = jnp.dot(x_ref[...], w1_ref[...], preferred_element_type=jnp.float32)
    h1 = _elu(h1 + b1_ref[...]) * s1_ref[...] + t1_ref[...]     # bias, ELU, eval-mode BN

    # conv path : ConvBlock #2
    h2 = jnp.dot(h1.astype(jnp.bfloat16), w2_ref[...], preferred_element_type=jnp.float32)
    h2 = _elu(h2 + b2_ref[...]) * s2_ref[...] + t2_ref[...]

    # skip path : fused double max-pool (one max over the 49 taps) + block-diag 1x1 conv
    pooled = jnp.max(pool_ref[...], axis=0)                     # (N, H2*W2*Cin), exact f32
    skip = jnp.dot(pooled.astype(jnp.bfloat16), ws_ref[...],
                   preferred_element_type=jnp.float32)

    # residual add, lane-dense store
    o_ref[...] = h2 + skip


@jax.jit
def resblock_pallas(x_nchw, params):
    n, cin, h, w = x_nchw.shape
    hd = params["w1"].shape[3]
    cout = params["w2"].shape[3]
    x = jnp.transpose(x_nchw, (0, 2, 3, 1)).astype(jnp.float32)       # NCHW -> NHWC

    # Weight-only preprocessing (could be cached across calls in real use).
    w1m, (ho1, wo1) = conv_to_matrix(params["w1"], h, w, 2, PAD)      # (H*W*Cin,  H1*W1*HD)
    w2m, (ho2, wo2) = conv_to_matrix(params["w2"], ho1, wo1, 2, PAD)  # (H1*W1*HD, H2*W2*Cout)
    wsm = blockdiag_1x1(params["ws"], ho2 * wo2)                      # (H2*W2*Cin, H2*W2*Cout)

    # Per-channel bias / folded-BN vectors tiled to the lane-dense position-major layout.
    b1t = jnp.tile(params["b1"], (1, ho1 * wo1))
    s1t = jnp.tile(params["s1"], (1, ho1 * wo1))
    t1t = jnp.tile(params["t1"], (1, ho1 * wo1))
    b2t = jnp.tile(params["b2"], (1, ho2 * wo2))
    s2t = jnp.tile(params["s2"], (1, ho2 * wo2))
    t2t = jnp.tile(params["t2"], (1, ho2 * wo2))

    x_flat = x.reshape(n, h * w * cin).astype(jnp.bfloat16)
    pool = pool_taps(x, ho2, wo2)                                     # (49, N, H2*W2*Cin) f32

    bf = jnp.bfloat16
    operands = (x_flat, w1m.astype(bf), b1t, s1t, t1t,
                w2m.astype(bf), b2t, s2t, t2t,
                pool, wsm.astype(bf))

    def full(a):   # whole array in VMEM, single grid step
        return pl.BlockSpec(a.shape, lambda *_: (0,) * a.ndim)

    out = pl.pallas_call(
        resblock_kernel,
        out_shape=jax.ShapeDtypeStruct((n, ho2 * wo2 * cout), jnp.float32),
        in_specs=[full(a) for a in operands],
        out_specs=pl.BlockSpec((n, ho2 * wo2 * cout), lambda *_: (0, 0)),
        compiler_params=pltpu.CompilerParams(vmem_limit_bytes=32 * 1024 * 1024),
    )(*operands)

    out = out.reshape(n, ho2, wo2, cout)                              # wrapper-side layout
    return jnp.transpose(out, (0, 3, 1, 2))                           # NHWC -> NCHW


# --------------------------------------------------------------------------------------------
# Pure-JAX reference (for verification).
# --------------------------------------------------------------------------------------------
def resblock_ref(x_nchw, params, quantize_matmul_operands=False):
    """With quantize_matmul_operands=True, conv/matmul operands are rounded to bf16 (f32
    accumulation) exactly like the kernel's MXU path (differences = summation order only)."""
    q = ((lambda a: a.astype(jnp.bfloat16).astype(jnp.float32))
         if quantize_matmul_operands else (lambda a: a))
    x = jnp.transpose(x_nchw, (0, 2, 3, 1)).astype(jnp.float32)

    def convblock(hh, ww, b, s, t):
        y = lax.conv_general_dilated(
            q(hh), q(ww), window_strides=(2, 2), padding=((PAD, PAD), (PAD, PAD)),
            dimension_numbers=("NHWC", "HWIO", "NHWC"),
            precision=lax.Precision.HIGHEST, preferred_element_type=jnp.float32)
        return _elu(y + b) * s + t

    hcv = convblock(x, params["w1"], params["b1"], params["s1"], params["t1"])
    hcv = convblock(hcv, params["w2"], params["b2"], params["s2"], params["t2"])

    def maxpool(a):
        return lax.reduce_window(a, -jnp.inf, lax.max,
                                 (1, 3, 3, 1), (1, 2, 2, 1),
                                 ((0, 0), (1, 1), (1, 1), (0, 0)))

    s = maxpool(maxpool(x))
    skip = jnp.einsum("nhwc,co->nhwo", q(s), q(params["ws"]),
                      precision=lax.Precision.HIGHEST,
                      preferred_element_type=jnp.float32)
    return jnp.transpose(hcv + skip, (0, 3, 1, 2))


def init_params(key, in_ch, hd_ch, out_ch):
    ks = jax.random.split(key, 14)

    def bn(kg, kb, km, kv, c):
        gamma = 1.0 + 0.1 * jax.random.normal(kg, (1, c), jnp.float32)
        beta = 0.1 * jax.random.normal(kb, (1, c), jnp.float32)
        mean = 0.1 * jax.random.normal(km, (1, c), jnp.float32)
        var = 1.0 + 0.1 * jax.random.uniform(kv, (1, c), dtype=jnp.float32)
        scale = gamma / jnp.sqrt(var + BN_EPS)
        shift = beta - mean * scale
        return scale, shift

    w1 = 0.05 * jax.random.normal(ks[0], (K_D, K_D, in_ch, hd_ch), jnp.float32)   # HWIO
    b1 = 0.05 * jax.random.normal(ks[1], (1, hd_ch), jnp.float32)
    s1, t1 = bn(ks[2], ks[3], ks[4], ks[5], hd_ch)
    w2 = 0.05 * jax.random.normal(ks[6], (K_D, K_D, hd_ch, out_ch), jnp.float32)  # HWIO
    b2 = 0.05 * jax.random.normal(ks[7], (1, out_ch), jnp.float32)
    s2, t2 = bn(ks[8], ks[9], ks[10], ks[11], out_ch)
    ws = 0.1 * jax.random.normal(ks[12], (in_ch, out_ch), jnp.float32)            # 1x1, no bias
    return dict(w1=w1, b1=b1, s1=s1, t1=t1, w2=w2, b2=b2, s2=s2, t2=t2, ws=ws)


if __name__ == "__main__":
    key = jax.random.PRNGKey(0)
    kx, kp = jax.random.split(key)

    N, Cin, H, W = 2, 4, 16, 16       # ResBlock(in_ch=4, hd_ch=8, out_ch=8, dim=2)
    HD, Cout = 8, 8
    x = jax.random.normal(kx, (N, Cin, H, W), jnp.float32)
    params = init_params(kp, Cin, HD, Cout)

    out = jax.block_until_ready(resblock_pallas(x, params))
    assert out.shape == (N, Cout, 4, 4), out.shape

    # (a) strict check vs a reference whose matmul operands are rounded to bf16 like the kernel
    #     (remaining differences: f32 accumulation order, transcendental ulps).
    ref_q = resblock_ref(x, params, quantize_matmul_operands=True)
    if not jnp.allclose(out, ref_q, atol=5e-3, rtol=5e-3):
        raise AssertionError(
            f"mismatch vs bf16-matched reference, max abs err = "
            f"{float(jnp.max(jnp.abs(out - ref_q)))}")

    # (b) sanity check vs the full-f32 reference; tolerance set by bf16 MXU operands.
    ref_f = resblock_ref(x, params)
    if not jnp.allclose(out, ref_f, atol=5e-2, rtol=5e-2):
        raise AssertionError(
            f"mismatch vs f32 reference, max abs err = "
            f"{float(jnp.max(jnp.abs(out - ref_f)))}")

    print("KERNEL_OK")
</pallas_src>

<mosaic_0001>
module attributes {stable_mosaic.version = 11 : i64} {
  func.func @resblock_kernel(%arg0: memref<2x1024xbf16, #tpu.memory_space<vmem>>, %arg1: memref<1024x512xbf16, #tpu.memory_space<vmem>>, %arg2: memref<1x512xf32, #tpu.memory_space<vmem>>, %arg3: memref<1x512xf32, #tpu.memory_space<vmem>>, %arg4: memref<1x512xf32, #tpu.memory_space<vmem>>, %arg5: memref<512x128xbf16, #tpu.memory_space<vmem>>, %arg6: memref<1x128xf32, #tpu.memory_space<vmem>>, %arg7: memref<1x128xf32, #tpu.memory_space<vmem>>, %arg8: memref<1x128xf32, #tpu.memory_space<vmem>>, %arg9: memref<49x2x64xf32, #tpu.memory_space<vmem>>, %arg10: memref<64x128xbf16, #tpu.memory_space<vmem>>, %arg11: memref<2x128xf32, #tpu.memory_space<vmem>>) attributes {dimension_semantics = [], scalar_prefetch = 0 : i64, scratch_operands = 0 : i64, tpu.core_type = #tpu.core_type<tc>} {
    %c0 = arith.constant 0 : index
    %c0_0 = arith.constant 0 : index
    %0 = vector.load %arg0[%c0, %c0_0] : memref<2x1024xbf16, #tpu.memory_space<vmem>>, vector<2x1024xbf16>
    %c0_1 = arith.constant 0 : index
    %c0_2 = arith.constant 0 : index
    %1 = vector.load %arg1[%c0_1, %c0_2] : memref<1024x512xbf16, #tpu.memory_space<vmem>>, vector<1024x512xbf16>
    %cst = arith.constant dense<0.000000e+00> : vector<2x512xf32>
    %2 = tpu.matmul %0, %1, %cst {dimension_numbers = #tpu.dot_dimension_numbers<[1], [0], [0], [1], [0, 0, 1, 1], [], []>} : vector<2x1024xbf16>, vector<1024x512xbf16>, vector<2x512xf32> -> vector<2x512xf32>
    %c0_3 = arith.constant 0 : index
    %c0_4 = arith.constant 0 : index
    %3 = vector.load %arg2[%c0_3, %c0_4] : memref<1x512xf32, #tpu.memory_space<vmem>>, vector<1x512xf32>
    %4 = vector.broadcast %3 : vector<1x512xf32> to vector<2x512xf32>
    %5 = arith.addf %2, %4 : vector<2x512xf32>
    %cst_5 = arith.constant 0.000000e+00 : f32
    %6 = vector.broadcast %cst_5 : f32 to vector<2x512xf32>
    %7 = arith.cmpf ogt, %5, %6 : vector<2x512xf32>
    %cst_6 = arith.constant 0.000000e+00 : f32
    %8 = vector.broadcast %cst_6 : f32 to vector<2x512xf32>
    %9 = arith.minimumf %5, %8 : vector<2x512xf32>
    %10 = math.exp %9 : vector<2x512xf32>
    %cst_7 = arith.constant 1.000000e+00 : f32
    %11 = vector.broadcast %cst_7 : f32 to vector<2x512xf32>
    %12 = arith.subf %10, %11 : vector<2x512xf32>
    %13 = arith.select %7, %5, %12 : vector<2x512xi1>, vector<2x512xf32>
    %c0_8 = arith.constant 0 : index
    %c0_9 = arith.constant 0 : index
    %14 = vector.load %arg3[%c0_8, %c0_9] : memref<1x512xf32, #tpu.memory_space<vmem>>, vector<1x512xf32>
    %15 = vector.broadcast %14 : vector<1x512xf32> to vector<2x512xf32>
    %16 = arith.mulf %13, %15 : vector<2x512xf32>
    %c0_10 = arith.constant 0 : index
    %c0_11 = arith.constant 0 : index
    %17 = vector.load %arg4[%c0_10, %c0_11] : memref<1x512xf32, #tpu.memory_space<vmem>>, vector<1x512xf32>
    %18 = vector.broadcast %17 : vector<1x512xf32> to vector<2x512xf32>
    %19 = arith.addf %16, %18 : vector<2x512xf32>
    %20 = arith.truncf %19 : vector<2x512xf32> to vector<2x512xbf16>
    %c0_12 = arith.constant 0 : index
    %c0_13 = arith.constant 0 : index
    %21 = vector.load %arg5[%c0_12, %c0_13] : memref<512x128xbf16, #tpu.memory_space<vmem>>, vector<512x128xbf16>
    %cst_14 = arith.constant dense<0.000000e+00> : vector<2x128xf32>
    %22 = tpu.matmul %20, %21, %cst_14 {dimension_numbers = #tpu.dot_dimension_numbers<[1], [0], [0], [1], [0, 0, 1, 1], [], []>} : vector<2x512xbf16>, vector<512x128xbf16>, vector<2x128xf32> -> vector<2x128xf32>
    %c0_15 = arith.constant 0 : index
    %c0_16 = arith.constant 0 : index
    %23 = vector.load %arg6[%c0_15, %c0_16] : memref<1x128xf32, #tpu.memory_space<vmem>>, vector<1x128xf32>
    %24 = vector.broadcast %23 : vector<1x128xf32> to vector<2x128xf32>
    %25 = arith.addf %22, %24 : vector<2x128xf32>
    %cst_17 = arith.constant 0.000000e+00 : f32
    %26 = vector.broadcast %cst_17 : f32 to vector<2x128xf32>
    %27 = arith.cmpf ogt, %25, %26 : vector<2x128xf32>
    %cst_18 = arith.constant 0.000000e+00 : f32
    %28 = vector.broadcast %cst_18 : f32 to vector<2x128xf32>
    %29 = arith.minimumf %25, %28 : vector<2x128xf32>
    %30 = math.exp %29 : vector<2x128xf32>
    %cst_19 = arith.constant 1.000000e+00 : f32
    %31 = vector.broadcast %cst_19 : f32 to vector<2x128xf32>
    %32 = arith.subf %30, %31 : vector<2x128xf32>
    %33 = arith.select %27, %25, %32 : vector<2x128xi1>, vector<2x128xf32>
    %c0_20 = arith.constant 0 : index
    %c0_21 = arith.constant 0 : index
    %34 = vector.load %arg7[%c0_20, %c0_21] : memref<1x128xf32, #tpu.memory_space<vmem>>, vector<1x128xf32>
    %35 = vector.broadcast %34 : vector<1x128xf32> to vector<2x128xf32>
    %36 = arith.mulf %33, %35 : vector<2x128xf32>
    %c0_22 = arith.constant 0 : index
    %c0_23 = arith.constant 0 : index
    %37 = vector.load %arg8[%c0_22, %c0_23] : memref<1x128xf32, #tpu.memory_space<vmem>>, vector<1x128xf32>
    %38 = vector.broadcast %37 : vector<1x128xf32> to vector<2x128xf32>
    %39 = arith.addf %36, %38 : vector<2x128xf32>
    %c0_24 = arith.constant 0 : index
    %c0_25 = arith.constant 0 : index
    %c0_26 = arith.constant 0 : index
    %40 = vector.load %arg9[%c0_24, %c0_25, %c0_26] : memref<49x2x64xf32, #tpu.memory_space<vmem>>, vector<49x2x64xf32>
    %cst_27 = arith.constant dense<0xFF800000> : vector<2x64xf32>
    %41 = vector.multi_reduction <maximumf>, %40, %cst_27 [0] : vector<49x2x64xf32> to vector<2x64xf32>
    %42 = arith.truncf %41 : vector<2x64xf32> to vector<2x64xbf16>
    %c0_28 = arith.constant 0 : index
    %c0_29 = arith.constant 0 : index
    %43 = vector.load %arg10[%c0_28, %c0_29] : memref<64x128xbf16, #tpu.memory_space<vmem>>, vector<64x128xbf16>
    %cst_30 = arith.constant dense<0.000000e+00> : vector<2x128xf32>
    %44 = tpu.matmul %42, %43, %cst_30 {dimension_numbers = #tpu.dot_dimension_numbers<[1], [0], [0], [1], [0, 0, 1, 1], [], []>} : vector<2x64xbf16>, vector<64x128xbf16>, vector<2x128xf32> -> vector<2x128xf32>
    %45 = arith.addf %39, %44 : vector<2x128xf32>
    %c0_31 = arith.constant 0 : index
    %c0_32 = arith.constant 0 : index
    %46 = vector.load %arg11[%c0_31, %c0_32] : memref<2x128xf32, #tpu.memory_space<vmem>>, vector<2x128xf32>
    tpu.vector_store %arg11[%c0_31, %c0_32], %45 {strides = array<i32>} : memref<2x128xf32, #tpu.memory_space<vmem>>, vector<2x128xf32>,
    return
  }
}

</mosaic_0001>

<llo_original>
// kernel: resblock_pallas.1
$region0: #{resblock_pallas.1}
  #allocation0 [shape = 'u32[]', space=smem, size = 0x4, offset = 0x4, fixed_abs, tag = 'smem constant byte address 0x4 - core index']
  #allocation1 [shape = 'u32[144,128]{1,0:T(1,128)}', space=vmem, size = 0x12000, scoped, tag = 'internal scratch']
  %s0 = inlined_call_operand.vmem [shape: bf16[2,1024], index: 0, kind: input, shape index: {}]
  %s1 = inlined_call_operand.vmem [shape: bf16[1024,512], index: 1, kind: input, shape index: {}]
  %s2 = inlined_call_operand.vmem [shape: f32[1,512], index: 2, kind: input, shape index: {}]
  %s3 = inlined_call_operand.vmem [shape: f32[1,512], index: 3, kind: input, shape index: {}]
  %s4 = inlined_call_operand.vmem [shape: f32[1,512], index: 4, kind: input, shape index: {}]
  %s5 = inlined_call_operand.vmem [shape: bf16[512,128], index: 5, kind: input, shape index: {}]
  %s6 = inlined_call_operand.vmem [shape: f32[1,128], index: 6, kind: input, shape index: {}]
  %s7 = inlined_call_operand.vmem [shape: f32[1,128], index: 7, kind: input, shape index: {}]
  %s8 = inlined_call_operand.vmem [shape: f32[1,128], index: 8, kind: input, shape index: {}]
  %s9 = inlined_call_operand.vmem [shape: f32[49,2,64], index: 9, kind: input, shape index: {}]
  %s10 = inlined_call_operand.vmem [shape: bf16[64,128], index: 10, kind: input, shape index: {}]
  %s11 = inlined_call_operand.vmem [shape: f32[2,128], index: 11, kind: output, shape index: {}]
  %s12 = sld [smem:[#allocation0]]
  $region54: #{resblock_pallas.1} parent=0
    _
  %s14 = ssub.s32 1, %s12
  %s15 = scalar_select 0, %s14, %s12
  // Predicated region
  $region2: #{resblock_pallas.1} parent=0 // pred_check
    _
  $region3: #{resblock_pallas.1} parent=0 // pred_check_branch
    %17 = sbr.rel (0) target = $region5
  $region4: #{resblock_pallas.1} parent=0 // pred_region
    _
  $region5: #{resblock_pallas.1} parent=0 // pred_fallthru
    _
  // Predicated region
  $region6: #{resblock_pallas.1} parent=0 // pred_check
    _
  $region7: #{resblock_pallas.1} parent=0 // pred_check_branch
    %19 = sbr.rel (0) target = $region9
  $region8: #{resblock_pallas.1} parent=0 // pred_region
    _
  $region9: #{resblock_pallas.1} parent=0 // pred_fallthru
    _
  // Predicated region
  $region10: #{resblock_pallas.1} parent=0 // pred_check
    _
  $region11: #{resblock_pallas.1} parent=0 // pred_check_branch
    %21 = sbr.rel (0) target = $region13
  $region12: #{resblock_pallas.1} parent=0 // pred_region
    _
  $region13: #{resblock_pallas.1} parent=0 // pred_fallthru
    _
  // Predicated region
  $region14: #{resblock_pallas.1} parent=0 // pred_check
    _
  $region15: #{resblock_pallas.1} parent=0 // pred_check_branch
    %23 = sbr.rel (0) target = $region17
  $region16: #{resblock_pallas.1} parent=0 // pred_region
    _
  $region17: #{resblock_pallas.1} parent=0 // pred_fallthru
    _
  // Predicated region
  $region18: #{resblock_pallas.1} parent=0 // pred_check
    _
  $region19: #{resblock_pallas.1} parent=0 // pred_check_branch
    %25 = sbr.rel (0) target = $region21
  $region20: #{resblock_pallas.1} parent=0 // pred_region
    _
  $region21: #{resblock_pallas.1} parent=0 // pred_fallthru
    _
  // Predicated region
  $region22: #{resblock_pallas.1} parent=0 // pred_check
    _
  $region23: #{resblock_pallas.1} parent=0 // pred_check_branch
    %27 = sbr.rel (0) target = $region25
  $region24: #{resblock_pallas.1} parent=0 // pred_region
    _
  $region25: #{resblock_pallas.1} parent=0 // pred_fallthru
    _
  // Predicated region
  $region26: #{resblock_pallas.1} parent=0 // pred_check
    _
  $region27: #{resblock_pallas.1} parent=0 // pred_check_branch
    %29 = sbr.rel (0) target = $region29
  $region28: #{resblock_pallas.1} parent=0 // pred_region
    _
  $region29: #{resblock_pallas.1} parent=0 // pred_fallthru
    _
  // Predicated region
  $region30: #{resblock_pallas.1} parent=0 // pred_check
    _
  $region31: #{resblock_pallas.1} parent=0 // pred_check_branch
    %31 = sbr.rel (0) target = $region33
  $region32: #{resblock_pallas.1} parent=0 // pred_region
    _
  $region33: #{resblock_pallas.1} parent=0 // pred_fallthru
    _
  // Predicated region
  $region34: #{resblock_pallas.1} parent=0 // pred_check
    _
  $region35: #{resblock_pallas.1} parent=0 // pred_check_branch
    %33 = sbr.rel (0) target = $region37
  $region36: #{resblock_pallas.1} parent=0 // pred_region
    _
  $region37: #{resblock_pallas.1} parent=0 // pred_fallthru
    _
  // Predicated region
  $region38: #{resblock_pallas.1} parent=0 // pred_check
    _
  $region39: #{resblock_pallas.1} parent=0 // pred_check_branch
    %35 = sbr.rel (0) target = $region41
  $region40: #{resblock_pallas.1} parent=0 // pred_region
    _
  $region41: #{resblock_pallas.1} parent=0 // pred_fallthru
    _
  // Predicated region
  $region42: #{resblock_pallas.1} parent=0 // pred_check
    _
  $region43: #{resblock_pallas.1} parent=0 // pred_check_branch
    %37 = sbr.rel (0) target = $region45
  $region44: #{resblock_pallas.1} parent=0 // pred_region
    _
  $region45: #{resblock_pallas.1} parent=0 // pred_fallthru
    _
  %v39 = vld [vmem:[%s0] sm:$0xff]
  %v40 = vld [vmem:[%s1] sm:$0xff]
  %v41 = vld [vmem:[%s1 + $0x8] sm:$0xff]
  %v42 = vld [vmem:[%s1 + $0x10] sm:$0xff]
  %v43 = vld [vmem:[%s1 + $0x18] sm:$0xff]
  %v44 = vld [vmem:[%s1 + $0x20] sm:$0xff]
  %v45 = vld [vmem:[%s1 + $0x28] sm:$0xff]
  %v46 = vld [vmem:[%s1 + $0x30] sm:$0xff]
  %v47 = vld [vmem:[%s1 + $0x38] sm:$0xff]
  %v48 = vld [vmem:[%s1 + $0x40] sm:$0xff]
  %v49 = vld [vmem:[%s1 + $0x48] sm:$0xff]
  %v50 = vld [vmem:[%s1 + $0x50] sm:$0xff]
  %v51 = vld [vmem:[%s1 + $0x58] sm:$0xff]
  %v52 = vld [vmem:[%s1 + $0x60] sm:$0xff]
  %v53 = vld [vmem:[%s1 + $0x68] sm:$0xff]
  %v54 = vld [vmem:[%s1 + $0x70] sm:$0xff]
  %v55 = vld [vmem:[%s1 + $0x78] sm:$0xff]
  %v56 = vld [vmem:[%s1 + $0x80] sm:$0xff]
  %v57 = vld [vmem:[%s1 + $0x88] sm:$0xff]
  %v58 = vld [vmem:[%s1 + $0x90] sm:$0xff]
  %v59 = vld [vmem:[%s1 + $0x98] sm:$0xff]
  %v60 = vld [vmem:[%s1 + $0xa0] sm:$0xff]
  %v61 = vld [vmem:[%s1 + $0xa8] sm:$0xff]
  %v62 = vld [vmem:[%s1 + $0xb0] sm:$0xff]
  %v63 = vld [vmem:[%s1 + $0xb8] sm:$0xff]
  %v64 = vld [vmem:[%s1 + $0xc0] sm:$0xff]
  %v65 = vld [vmem:[%s1 + $0xc8] sm:$0xff]
  %v66 = vld [vmem:[%s1 + $0xd0] sm:$0xff]
  %v67 = vld [vmem:[%s1 + $0xd8] sm:$0xff]
  %v68 = vld [vmem:[%s1 + $0xe0] sm:$0xff]
  %v69 = vld [vmem:[%s1 + $0xe8] sm:$0xff]
  %v70 = vld [vmem:[%s1 + $0xf0] sm:$0xff]
  %v71 = vld [vmem:[%s1 + $0xf8] sm:$0xff]
  %v72 = vld [vmem:[%s1 + $0x100] sm:$0xff]
  %v73 = vld [vmem:[%s1 + $0x108] sm:$0xff]
  %v74 = vld [vmem:[%s1 + $0x110] sm:$0xff]
  %v75 = vld [vmem:[%s1 + $0x118] sm:$0xff]
  %v76 = vld [vmem:[%s1 + $0x120] sm:$0xff]
  %v77 = vld [vmem:[%s1 + $0x128] sm:$0xff]
  %v78 = vld [vmem:[%s1 + $0x130] sm:$0xff]
  %v79 = vld [vmem:[%s1 + $0x138] sm:$0xff]
  %v80 = vld [vmem:[%s1 + $0x140] sm:$0xff]
  %v81 = vld [vmem:[%s1 + $0x148] sm:$0xff]
  %v82 = vld [vmem:[%s1 + $0x150] sm:$0xff]
  %v83 = vld [vmem:[%s1 + $0x158] sm:$0xff]
  %v84 = vld [vmem:[%s1 + $0x160] sm:$0xff]
  %v85 = vld [vmem:[%s1 + $0x168] sm:$0xff]
  %v86 = vld [vmem:[%s1 + $0x170] sm:$0xff]
  %v87 = vld [vmem:[%s1 + $0x178] sm:$0xff]
  %v88 = vld [vmem:[%s1 + $0x180] sm:$0xff]
  %v89 = vld [vmem:[%s1 + $0x188] sm:$0xff]
  %v90 = vld [vmem:[%s1 + $0x190] sm:$0xff]
  %v91 = vld [vmem:[%s1 + $0x198] sm:$0xff]
  %v92 = vld [vmem:[%s1 + $0x1a0] sm:$0xff]
  %v93 = vld [vmem:[%s1 + $0x1a8] sm:$0xff]
  %v94 = vld [vmem:[%s1 + $0x1b0] sm:$0xff]
  %v95 = vld [vmem:[%s1 + $0x1b8] sm:$0xff]
  %v96 = vld [vmem:[%s1 + $0x1c0] sm:$0xff]
  %v97 = vld [vmem:[%s1 + $0x1c8] sm:$0xff]
  %v98 = vld [vmem:[%s1 + $0x1d0] sm:$0xff]
  %v99 = vld [vmem:[%s1 + $0x1d8] sm:$0xff]
  %v100 = vld [vmem:[%s1 + $0x1e0] sm:$0xff]
  %v101 = vld [vmem:[%s1 + $0x1e8] sm:$0xff]
  %v102 = vld [vmem:[%s1 + $0x1f0] sm:$0xff]
  %v103 = vld [vmem:[%s1 + $0x1f8] sm:$0xff]
  %v104 = vld [vmem:[%s1 + $0x200] sm:$0xff]
  %v105 = vld [vmem:[%s1 + $0x208] sm:$0xff]
  %v106 = vld [vmem:[%s1 + $0x210] sm:$0xff]
  %v107 = vld [vmem:[%s1 + $0x218] sm:$0xff]
  %v108 = vld [vmem:[%s1 + $0x220] sm:$0xff]
  %v109 = vld [vmem:[%s1 + $0x228] sm:$0xff]
  %v110 = vld [vmem:[%s1 + $0x230] sm:$0xff]
  %v111 = vld [vmem:[%s1 + $0x238] sm:$0xff]
  %v112 = vld [vmem:[%s1 + $0x240] sm:$0xff]
  %v113 = vld [vmem:[%s1 + $0x248] sm:$0xff]
  %v114 = vld [vmem:[%s1 + $0x250] sm:$0xff]
  %v115 = vld [vmem:[%s1 + $0x258] sm:$0xff]
  %v116 = vld [vmem:[%s1 + $0x260] sm:$0xff]
  %v117 = vld [vmem:[%s1 + $0x268] sm:$0xff]
  %v118 = vld [vmem:[%s1 + $0x270] sm:$0xff]
  %v119 = vld [vmem:[%s1 + $0x278] sm:$0xff]
  %v120 = vld [vmem:[%s1 + $0x280] sm:$0xff]
  %v121 = vld [vmem:[%s1 + $0x288] sm:$0xff]
  %v122 = vld [vmem:[%s1 + $0x290] sm:$0xff]
  %v123 = vld [vmem:[%s1 + $0x298] sm:$0xff]
  %v124 = vld [vmem:[%s1 + $0x2a0] sm:$0xff]
  %v125 = vld [vmem:[%s1 + $0x2a8] sm:$0xff]
  %v126 = vld [vmem:[%s1 + $0x2b0] sm:$0xff]
  %v127 = vld [vmem:[%s1 + $0x2b8] sm:$0xff]
  %v128 = vld [vmem:[%s1 + $0x2c0] sm:$0xff]
  %v129 = vld [vmem:[%s1 + $0x2c8] sm:$0xff]
  %v130 = vld [vmem:[%s1 + $0x2d0] sm:$0xff]
  %v131 = vld [vmem:[%s1 + $0x2d8] sm:$0xff]
  %v132 = vld [vmem:[%s1 + $0x2e0] sm:$0xff]
  %v133 = vld [vmem:[%s1 + $0x2e8] sm:$0xff]
  %v134 = vld [vmem:[%s1 + $0x2f0] sm:$0xff]
  %v135 = vld [vmem:[%s1 + $0x2f8] sm:$0xff]
  %v136 = vld [vmem:[%s1 + $0x300] sm:$0xff]
  %v137 = vld [vmem:[%s1 + $0x308] sm:$0xff]
  %v138 = vld [vmem:[%s1 + $0x310] sm:$0xff]
  %v139 = vld [vmem:[%s1 + $0x318] sm:$0xff]
  %v140 = vld [vmem:[%s1 + $0x320] sm:$0xff]
  %v141 = vld [vmem:[%s1 + $0x328] sm:$0xff]
  %v142 = vld [vmem:[%s1 + $0x330] sm:$0xff]
  %v143 = vld [vmem:[%s1 + $0x338] sm:$0xff]
  %v144 = vld [vmem:[%s1 + $0x340] sm:$0xff]
  %v145 = vld [vmem:[%s1 + $0x348] sm:$0xff]
  %v146 = vld [vmem:[%s1 + $0x350] sm:$0xff]
  %v147 = vld [vmem:[%s1 + $0x358] sm:$0xff]
  %v148 = vld [vmem:[%s1 + $0x360] sm:$0xff]
  %v149 = vld [vmem:[%s1 + $0x368] sm:$0xff]
  %v150 = vld [vmem:[%s1 + $0x370] sm:$0xff]
  %v151 = vld [vmem:[%s1 + $0x378] sm:$0xff]
  %v152 = vld [vmem:[%s1 + $0x380] sm:$0xff]
  %v153 = vld [vmem:[%s1 + $0x388] sm:$0xff]
  %v154 = vld [vmem:[%s1 + $0x390] sm:$0xff]
  %v155 = vld [vmem:[%s1 + $0x398] sm:$0xff]
  %v156 = vld [vmem:[%s1 + $0x3a0] sm:$0xff]
  %v157 = vld [vmem:[%s1 + $0x3a8] sm:$0xff]
  %v158 = vld [vmem:[%s1 + $0x3b0] sm:$0xff]
  %v159 = vld [vmem:[%s1 + $0x3b8] sm:$0xff]
  %v160 = vld [vmem:[%s1 + $0x3c0] sm:$0xff]
  %v161 = vld [vmem:[%s1 + $0x3c8] sm:$0xff]
  %v162 = vld [vmem:[%s1 + $0x3d0] sm:$0xff]
  %v163 = vld [vmem:[%s1 + $0x3d8] sm:$0xff]
  %v164 = vld [vmem:[%s1 + $0x3e0] sm:$0xff]
  %v165 = vld [vmem:[%s1 + $0x3e8] sm:$0xff]
  %v166 = vld [vmem:[%s1 + $0x3f0] sm:$0xff]
  %v167 = vld [vmem:[%s1 + $0x3f8] sm:$0xff]
  %v168 = vld [vmem:[%s1 + $0x400] sm:$0xff]
  %v169 = vld [vmem:[%s1 + $0x408] sm:$0xff]
  %v170 = vld [vmem:[%s1 + $0x410] sm:$0xff]
  %v171 = vld [vmem:[%s1 + $0x418] sm:$0xff]
  %v172 = vld [vmem:[%s1 + $0x420] sm:$0xff]
  %v173 = vld [vmem:[%s1 + $0x428] sm:$0xff]
  %v174 = vld [vmem:[%s1 + $0x430] sm:$0xff]
  %v175 = vld [vmem:[%s1 + $0x438] sm:$0xff]
  %v176 = vld [vmem:[%s1 + $0x440] sm:$0xff]
  %v177 = vld [vmem:[%s1 + $0x448] sm:$0xff]
  %v178 = vld [vmem:[%s1 + $0x450] sm:$0xff]
  %v179 = vld [vmem:[%s1 + $0x458] sm:$0xff]
  %v180 = vld [vmem:[%s1 + $0x460] sm:$0xff]
  %v181 = vld [vmem:[%s1 + $0x468] sm:$0xff]
  %v182 = vld [vmem:[%s1 + $0x470] sm:$0xff]
  %v183 = vld [vmem:[%s1 + $0x478] sm:$0xff]
  %v184 = vld [vmem:[%s1 + $0x480] sm:$0xff]
  %v185 = vld [vmem:[%s1 + $0x488] sm:$0xff]
  %v186 = vld [vmem:[%s1 + $0x490] sm:$0xff]
  %v187 = vld [vmem:[%s1 + $0x498] sm:$0xff]
  %v188 = vld [vmem:[%s1 + $0x4a0] sm:$0xff]
  %v189 = vld [vmem:[%s1 + $0x4a8] sm:$0xff]
  %v190 = vld [vmem:[%s1 + $0x4b0] sm:$0xff]
  %v191 = vld [vmem:[%s1 + $0x4b8] sm:$0xff]
  %v192 = vld [vmem:[%s1 + $0x4c0] sm:$0xff]
  %v193 = vld [vmem:[%s1 + $0x4c8] sm:$0xff]
  %v194 = vld [vmem:[%s1 + $0x4d0] sm:$0xff]
  %v195 = vld [vmem:[%s1 + $0x4d8] sm:$0xff]
  %v196 = vld [vmem:[%s1 + $0x4e0] sm:$0xff]
  %v197 = vld [vmem:[%s1 + $0x4e8] sm:$0xff]
  %v198 = vld [vmem:[%s1 + $0x4f0] sm:$0xff]
  %v199 = vld [vmem:[%s1 + $0x4f8] sm:$0xff]
  %v200 = vld [vmem:[%s1 + $0x500] sm:$0xff]
  %v201 = vld [vmem:[%s1 + $0x508] sm:$0xff]
  %v202 = vld [vmem:[%s1 + $0x510] sm:$0xff]
  %v203 = vld [vmem:[%s1 + $0x518] sm:$0xff]
  %v204 = vld [vmem:[%s1 + $0x520] sm:$0xff]
  %v205 = vld [vmem:[%s1 + $0x528] sm:$0xff]
  %v206 = vld [vmem:[%s1 + $0x530] sm:$0xff]
  %v207 = vld [vmem:[%s1 + $0x538] sm:$0xff]
  %v208 = vld [vmem:[%s1 + $0x540] sm:$0xff]
  %v209 = vld [vmem:[%s1 + $0x548] sm:$0xff]
  %v210 = vld [vmem:[%s1 + $0x550] sm:$0xff]
  %v211 = vld [vmem:[%s1 + $0x558] sm:$0xff]
  %v212 = vld [vmem:[%s1 + $0x560] sm:$0xff]
  %v213 = vld [vmem:[%s1 + $0x568] sm:$0xff]
  %v214 = vld [vmem:[%s1 + $0x570] sm:$0xff]
  %v215 = vld [vmem:[%s1 + $0x578] sm:$0xff]
  %v216 = vld [vmem:[%s1 + $0x580] sm:$0xff]
  %v217 = vld [vmem:[%s1 + $0x588] sm:$0xff]
  %v218 = vld [vmem:[%s1 + $0x590] sm:$0xff]
  %v219 = vld [vmem:[%s1 + $0x598] sm:$0xff]
  %v220 = vld [vmem:[%s1 + $0x5a0] sm:$0xff]
  %v221 = vld [vmem:[%s1 + $0x5a8] sm:$0xff]
  %v222 = vld [vmem:[%s1 + $0x5b0] sm:$0xff]
  %v223 = vld [vmem:[%s1 + $0x5b8] sm:$0xff]
  %v224 = vld [vmem:[%s1 + $0x5c0] sm:$0xff]
  %v225 = vld [vmem:[%s1 + $0x5c8] sm:$0xff]
  %v226 = vld [vmem:[%s1 + $0x5d0] sm:$0xff]
  %v227 = vld [vmem:[%s1 + $0x5d8] sm:$0xff]
  %v228 = vld [vmem:[%s1 + $0x5e0] sm:$0xff]
  %v229 = vld [vmem:[%s1 + $0x5e8] sm:$0xff]
  %v230 = vld [vmem:[%s1 + $0x5f0] sm:$0xff]
  %v231 = vld [vmem:[%s1 + $0x5f8] sm:$0xff]
  %v232 = vld [vmem:[%s1 + $0x600] sm:$0xff]
  %v233 = vld [vmem:[%s1 + $0x608] sm:$0xff]
  %v234 = vld [vmem:[%s1 + $0x610] sm:$0xff]
  %v235 = vld [vmem:[%s1 + $0x618] sm:$0xff]
  %v236 = vld [vmem:[%s1 + $0x620] sm:$0xff]
  %v237 = vld [vmem:[%s1 + $0x628] sm:$0xff]
  %v238 = vld [vmem:[%s1 + $0x630] sm:$0xff]
  %v239 = vld [vmem:[%s1 + $0x638] sm:$0xff]
  %v240 = vld [vmem:[%s1 + $0x640] sm:$0xff]
  %v241 = vld [vmem:[%s1 + $0x648] sm:$0xff]
  %v242 = vld [vmem:[%s1 + $0x650] sm:$0xff]
  %v243 = vld [vmem:[%s1 + $0x658] sm:$0xff]
  %v244 = vld [vmem:[%s1 + $0x660] sm:$0xff]
  %v245 = vld [vmem:[%s1 + $0x668] sm:$0xff]
  %v246 = vld [vmem:[%s1 + $0x670] sm:$0xff]
  %v247 = vld [vmem:[%s1 + $0x678] sm:$0xff]
  %v248 = vld [vmem:[%s1 + $0x680] sm:$0xff]
  %v249 = vld [vmem:[%s1 + $0x688] sm:$0xff]
  %v250 = vld [vmem:[%s1 + $0x690] sm:$0xff]
  %v251 = vld [vmem:[%s1 + $0x698] sm:$0xff]
  %v252 = vld [vmem:[%s1 + $0x6a0] sm:$0xff]
  %v253 = vld [vmem:[%s1 + $0x6a8] sm:$0xff]
  %v254 = vld [vmem:[%s1 + $0x6b0] sm:$0xff]
  %v255 = vld [vmem:[%s1 + $0x6b8] sm:$0xff]
  %v256 = vld [vmem:[%s1 + $0x6c0] sm:$0xff]
  %v257 = vld [vmem:[%s1 + $0x6c8] sm:$0xff]
  %v258 = vld [vmem:[%s1 + $0x6d0] sm:$0xff]
  %v259 = vld [vmem:[%s1 + $0x6d8] sm:$0xff]
  %v260 = vld [vmem:[%s1 + $0x6e0] sm:$0xff]
  %v261 = vld [vmem:[%s1 + $0x6e8] sm:$0xff]
  %v262 = vld [vmem:[%s1 + $0x6f0] sm:$0xff]
  %v263 = vld [vmem:[%s1 + $0x6f8] sm:$0xff]
  %v264 = vld [vmem:[%s1 + $0x700] sm:$0xff]
  %v265 = vld [vmem:[%s1 + $0x708] sm:$0xff]
  %v266 = vld [vmem:[%s1 + $0x710] sm:$0xff]
  %v267 = vld [vmem:[%s1 + $0x718] sm:$0xff]
  %v268 = vld [vmem:[%s1 + $0x720] sm:$0xff]
  %v269 = vld [vmem:[%s1 + $0x728] sm:$0xff]
  %v270 = vld [vmem:[%s1 + $0x730] sm:$0xff]
  %v271 = vld [vmem:[%s1 + $0x738] sm:$0xff]
  %v272 = vld [vmem:[%s1 + $0x740] sm:$0xff]
  %v273 = vld [vmem:[%s1 + $0x748] sm:$0xff]
  %v274 = vld [vmem:[%s1 + $0x750] sm:$0xff]
  %v275 = vld [vmem:[%s1 + $0x758] sm:$0xff]
  %v276 = vld [vmem:[%s1 + $0x760] sm:$0xff]
  %v277 = vld [vmem:[%s1 + $0x768] sm:$0xff]
  %v278 = vld [vmem:[%s1 + $0x770] sm:$0xff]
  %v279 = vld [vmem:[%s1 + $0x778] sm:$0xff]
  %v280 = vld [vmem:[%s1 + $0x780] sm:$0xff]
  %v281 = vld [vmem:[%s1 + $0x788] sm:$0xff]
  %v282 = vld [vmem:[%s1 + $0x790] sm:$0xff]
  %v283 = vld [vmem:[%s1 + $0x798] sm:$0xff]
  %v284 = vld [vmem:[%s1 + $0x7a0] sm:$0xff]
  %v285 = vld [vmem:[%s1 + $0x7a8] sm:$0xff]
  %v286 = vld [vmem:[%s1 + $0x7b0] sm:$0xff]
  %v287 = vld [vmem:[%s1 + $0x7b8] sm:$0xff]
  %v288 = vld [vmem:[%s1 + $0x7c0] sm:$0xff]
  %v289 = vld [vmem:[%s1 + $0x7c8] sm:$0xff]
  %v290 = vld [vmem:[%s1 + $0x7d0] sm:$0xff]
  %v291 = vld [vmem:[%s1 + $0x7d8] sm:$0xff]
  %v292 = vld [vmem:[%s1 + $0x7e0] sm:$0xff]
  %v293 = vld [vmem:[%s1 + $0x7e8] sm:$0xff]
  %v294 = vld [vmem:[%s1 + $0x7f0] sm:$0xff]
  %v295 = vld [vmem:[%s1 + $0x7f8] sm:$0xff]
  %v296 = vld [vmem:[%s2] sm:$0xf]
  %v298 = vlaneseq
  %v299 = vshrl.u32 %v298, 7
  %v300 = vsub.s32 0, %v299
  %v301 = vrot.slane %v296, %v300
  %v302 = vlaneseq
  %v303 = vshrl.u32 %v302, 7
  %v304 = vsub.s32 1, %v303
  %v305 = vrot.slane %v296, %v304
  %v306 = vlaneseq
  %v307 = vshrl.u32 %v306, 7
  %v308 = vsub.s32 2, %v307
  %v309 = vrot.slane %v296, %v308
  %v310 = vlaneseq
  %v311 = vshrl.u32 %v310, 7
  %v312 = vsub.s32 3, %v311
  %v313 = vrot.slane %v296, %v312
  %v319 = vcombine.high %v39, %v39
  %v321 = vunpack.c.l.s4 1966171168
  %v322 = vunpack.c.0.s8 %v321
  %v323 = vlaneseq
  %v324 = vshrl.u32 %v323, 7
  %v325 = vsub.s32 %v322, %v324
  %v326 = vrot.slane %v39, %v325
  %v328 = vunpack.c.l.s4 1966171168
  %v329 = vunpack.c.0.s8 %v328
  %v330 = vlaneseq
  %v331 = vshrl.u32 %v330, 7
  %v332 = vsub.s32 %v329, %v331
  %v333 = vrot.slane %v319, %v332
  %v334 = vcombine.high %v326, %v326
  %v335 = vcombine.high %v333, %v333
  %v337 = vunpack.c.l.s4 1966171168
  %v338 = vunpack.c.0.s8 %v337
  %v339 = vlaneseq
  %v340 = vshrl.u32 %v339, 7
  %v341 = vsub.s32 %v338, %v340
  %v342 = vrot.slane %v326, %v341
  %v344 = vunpack.c.l.s4 1966171168
  %v345 = vunpack.c.0.s8 %v344
  %v346 = vlaneseq
  %v347 = vshrl.u32 %v346, 7
  %v348 = vsub.s32 %v345, %v347
  %v349 = vrot.slane %v333, %v348
  %v351 = vunpack.c.l.s4 1966171168
  %v352 = vunpack.c.0.s8 %v351
  %v353 = vlaneseq
  %v354 = vshrl.u32 %v353, 7
  %v355 = vsub.s32 %v352, %v354
  %v356 = vrot.slane %v334, %v355
  %v358 = vunpack.c.l.s4 1966171168
  %v359 = vunpack.c.0.s8 %v358
  %v360 = vlaneseq
  %v361 = vshrl.u32 %v360, 7
  %v362 = vsub.s32 %v359, %v361
  %v363 = vrot.slane %v335, %v362
  %v364 = vcombine.high %v342, %v342
  %v365 = vcombine.high %v349, %v349
  %v366 = vcombine.high %v356, %v356
  %v367 = vcombine.high %v363, %v363
  %v632 = vunpack.c.l.b16 %v40
  %v633 = vunpack.c.h.b16 %v40
  %v634 = vunpack.c.l.b16 %v41
  %v635 = vunpack.c.h.b16 %v41
  %v636 = vunpack.c.l.b16 %v42
  %v637 = vunpack.c.h.b16 %v42
  %v638 = vunpack.c.l.b16 %v43
  %v639 = vunpack.c.h.b16 %v43
  %v640 = vunpack.c.l.b16 %v44
  %v641 = vunpack.c.h.b16 %v44
  %v642 = vunpack.c.l.b16 %v45
  %v643 = vunpack.c.h.b16 %v45
  %v644 = vunpack.c.l.b16 %v46
  %v645 = vunpack.c.h.b16 %v46
  %v646 = vunpack.c.l.b16 %v47
  %v647 = vunpack.c.h.b16 %v47
  %v648 = vunpack.c.l.b16 %v48
  %v649 = vunpack.c.h.b16 %v48
  %v650 = vunpack.c.l.b16 %v49
  %v651 = vunpack.c.h.b16 %v49
  %v652 = vunpack.c.l.b16 %v50
  %v653 = vunpack.c.h.b16 %v50
  %v654 = vunpack.c.l.b16 %v51
  %v655 = vunpack.c.h.b16 %v51
  %v656 = vunpack.c.l.b16 %v52
  %v657 = vunpack.c.h.b16 %v52
  %v658 = vunpack.c.l.b16 %v53
  %v659 = vunpack.c.h.b16 %v53
  %v660 = vunpack.c.l.b16 %v54
  %v661 = vunpack.c.h.b16 %v54
  %v662 = vunpack.c.l.b16 %v55
  %v663 = vunpack.c.h.b16 %v55
  %v664 = vunpack.c.l.b16 %v56
  %v665 = vunpack.c.h.b16 %v56
  %v666 = vunpack.c.l.b16 %v57
  %v667 = vunpack.c.h.b16 %v57
  %v668 = vunpack.c.l.b16 %v58
  %v669 = vunpack.c.h.b16 %v58
  %v670 = vunpack.c.l.b16 %v59
  %v671 = vunpack.c.h.b16 %v59
  %v672 = vunpack.c.l.b16 %v60
  %v673 = vunpack.c.h.b16 %v60
  %v674 = vunpack.c.l.b16 %v61
  %v675 = vunpack.c.h.b16 %v61
  %v676 = vunpack.c.l.b16 %v62
  %v677 = vunpack.c.h.b16 %v62
  %v678 = vunpack.c.l.b16 %v63
  %v679 = vunpack.c.h.b16 %v63
  %v680 = vunpack.c.l.b16 %v64
  %v681 = vunpack.c.h.b16 %v64
  %v682 = vunpack.c.l.b16 %v65
  %v683 = vunpack.c.h.b16 %v65
  %v684 = vunpack.c.l.b16 %v66
  %v685 = vunpack.c.h.b16 %v66
  %v686 = vunpack.c.l.b16 %v67
  %v687 = vunpack.c.h.b16 %v67
  %v688 = vunpack.c.l.b16 %v68
  %v689 = vunpack.c.h.b16 %v68
  %v690 = vunpack.c.l.b16 %v69
  %v691 = vunpack.c.h.b16 %v69
  %v692 = vunpack.c.l.b16 %v70
  %v693 = vunpack.c.h.b16 %v70
  %v694 = vunpack.c.l.b16 %v71
  %v695 = vunpack.c.h.b16 %v71
  %v696 = vunpack.c.l.b16 %v72
  %v697 = vunpack.c.h.b16 %v72
  %v698 = vunpack.c.l.b16 %v73
  %v699 = vunpack.c.h.b16 %v73
  %v700 = vunpack.c.l.b16 %v74
  %v701 = vunpack.c.h.b16 %v74
  %v702 = vunpack.c.l.b16 %v75
  %v703 = vunpack.c.h.b16 %v75
  %v704 = vunpack.c.l.b16 %v76
  %v705 = vunpack.c.h.b16 %v76
  %v706 = vunpack.c.l.b16 %v77
  %v707 = vunpack.c.h.b16 %v77
  %v708 = vunpack.c.l.b16 %v78
  %v709 = vunpack.c.h.b16 %v78
  %v710 = vunpack.c.l.b16 %v79
  %v711 = vunpack.c.h.b16 %v79
  %v712 = vunpack.c.l.b16 %v80
  %v713 = vunpack.c.h.b16 %v80
  %v714 = vunpack.c.l.b16 %v81
  %v715 = vunpack.c.h.b16 %v81
  %v716 = vunpack.c.l.b16 %v82
  %v717 = vunpack.c.h.b16 %v82
  %v718 = vunpack.c.l.b16 %v83
  %v719 = vunpack.c.h.b16 %v83
  %v720 = vunpack.c.l.b16 %v84
  %v721 = vunpack.c.h.b16 %v84
  %v722 = vunpack.c.l.b16 %v85
  %v723 = vunpack.c.h.b16 %v85
  %v724 = vunpack.c.l.b16 %v86
  %v725 = vunpack.c.h.b16 %v86
  %v726 = vunpack.c.l.b16 %v87
  %v727 = vunpack.c.h.b16 %v87
  %v728 = vunpack.c.l.b16 %v88
  %v729 = vunpack.c.h.b16 %v88
  %v730 = vunpack.c.l.b16 %v89
  %v731 = vunpack.c.h.b16 %v89
  %v732 = vunpack.c.l.b16 %v90
  %v733 = vunpack.c.h.b16 %v90
  %v734 = vunpack.c.l.b16 %v91
  %v735 = vunpack.c.h.b16 %v91
  %v736 = vunpack.c.l.b16 %v92
  %v737 = vunpack.c.h.b16 %v92
  %v738 = vunpack.c.l.b16 %v93
  %v739 = vunpack.c.h.b16 %v93
  %v740 = vunpack.c.l.b16 %v94
  %v741 = vunpack.c.h.b16 %v94
  %v742 = vunpack.c.l.b16 %v95
  %v743 = vunpack.c.h.b16 %v95
  %v744 = vunpack.c.l.b16 %v96
  %v745 = vunpack.c.h.b16 %v96
  %v746 = vunpack.c.l.b16 %v97
  %v747 = vunpack.c.h.b16 %v97
  %v748 = vunpack.c.l.b16 %v98
  %v749 = vunpack.c.h.b16 %v98
  %v750 = vunpack.c.l.b16 %v99
  %v751 = vunpack.c.h.b16 %v99
  %v752 = vunpack.c.l.b16 %v100
  %v753 = vunpack.c.h.b16 %v100
  %v754 = vunpack.c.l.b16 %v101
  %v755 = vunpack.c.h.b16 %v101
  %v756 = vunpack.c.l.b16 %v102
  %v757 = vunpack.c.h.b16 %v102
  %v758 = vunpack.c.l.b16 %v103
  %v759 = vunpack.c.h.b16 %v103
  %v760 = vunpack.c.l.b16 %v104
  %v761 = vunpack.c.h.b16 %v104
  %v762 = vunpack.c.l.b16 %v105
  %v763 = vunpack.c.h.b16 %v105
  %v764 = vunpack.c.l.b16 %v106
  %v765 = vunpack.c.h.b16 %v106
  %v766 = vunpack.c.l.b16 %v107
  %v767 = vunpack.c.h.b16 %v107
  %v768 = vunpack.c.l.b16 %v108
  %v769 = vunpack.c.h.b16 %v108
  %v770 = vunpack.c.l.b16 %v109
  %v771 = vunpack.c.h.b16 %v109
  %v772 = vunpack.c.l.b16 %v110
  %v773 = vunpack.c.h.b16 %v110
  %v774 = vunpack.c.l.b16 %v111
  %v775 = vunpack.c.h.b16 %v111
  %v776 = vunpack.c.l.b16 %v112
  %v777 = vunpack.c.h.b16 %v112
  %v778 = vunpack.c.l.b16 %v113
  %v779 = vunpack.c.h.b16 %v113
  %v780 = vunpack.c.l.b16 %v114
  %v781 = vunpack.c.h.b16 %v114
  %v782 = vunpack.c.l.b16 %v115
  %v783 = vunpack.c.h.b16 %v115
  %v784 = vunpack.c.l.b16 %v116
  %v785 = vunpack.c.h.b16 %v116
  %v786 = vunpack.c.l.b16 %v117
  %v787 = vunpack.c.h.b16 %v117
  %v788 = vunpack.c.l.b16 %v118
  %v789 = vunpack.c.h.b16 %v118
  %v790 = vunpack.c.l.b16 %v119
  %v791 = vunpack.c.h.b16 %v119
  %v792 = vunpack.c.l.b16 %v120
  %v793 = vunpack.c.h.b16 %v120
  %v794 = vunpack.c.l.b16 %v121
  %v795 = vunpack.c.h.b16 %v121
  %v796 = vunpack.c.l.b16 %v122
  %v797 = vunpack.c.h.b16 %v122
  %v798 = vunpack.c.l.b16 %v123
  %v799 = vunpack.c.h.b16 %v123
  %v800 = vunpack.c.l.b16 %v124
  %v801 = vunpack.c.h.b16 %v124
  %v802 = vunpack.c.l.b16 %v125
  %v803 = vunpack.c.h.b16 %v125
  %v804 = vunpack.c.l.b16 %v126
  %v805 = vunpack.c.h.b16 %v126
  %v806 = vunpack.c.l.b16 %v127
  %v807 = vunpack.c.h.b16 %v127
  %v808 = vunpack.c.l.b16 %v128
  %v809 = vunpack.c.h.b16 %v128
  %v810 = vunpack.c.l.b16 %v129
  %v811 = vunpack.c.h.b16 %v129
  %v812 = vunpack.c.l.b16 %v130
  %v813 = vunpack.c.h.b16 %v130
  %v814 = vunpack.c.l.b16 %v131
  %v815 = vunpack.c.h.b16 %v131
  %v816 = vunpack.c.l.b16 %v132
  %v817 = vunpack.c.h.b16 %v132
  %v818 = vunpack.c.l.b16 %v133
  %v819 = vunpack.c.h.b16 %v133
  %v820 = vunpack.c.l.b16 %v134
  %v821 = vunpack.c.h.b16 %v134
  %v822 = vunpack.c.l.b16 %v135
  %v823 = vunpack.c.h.b16 %v135
  %v824 = vunpack.c.l.b16 %v136
  %v825 = vunpack.c.h.b16 %v136
  %v826 = vunpack.c.l.b16 %v137
  %v827 = vunpack.c.h.b16 %v137
  %v828 = vunpack.c.l.b16 %v138
  %v829 = vunpack.c.h.b16 %v138
  %v830 = vunpack.c.l.b16 %v139
  %v831 = vunpack.c.h.b16 %v139
  %v832 = vunpack.c.l.b16 %v140
  %v833 = vunpack.c.h.b16 %v140
  %v834 = vunpack.c.l.b16 %v141
  %v835 = vunpack.c.h.b16 %v141
  %v836 = vunpack.c.l.b16 %v142
  %v837 = vunpack.c.h.b16 %v142
  %v838 = vunpack.c.l.b16 %v143
  %v839 = vunpack.c.h.b16 %v143
  %v840 = vunpack.c.l.b16 %v144
  %v841 = vunpack.c.h.b16 %v144
  %v842 = vunpack.c.l.b16 %v145
  %v843 = vunpack.c.h.b16 %v145
  %v844 = vunpack.c.l.b16 %v146
  %v845 = vunpack.c.h.b16 %v146
  %v846 = vunpack.c.l.b16 %v147
  %v847 = vunpack.c.h.b16 %v147
  %v848 = vunpack.c.l.b16 %v148
  %v849 = vunpack.c.h.b16 %v148
  %v850 = vunpack.c.l.b16 %v149
  %v851 = vunpack.c.h.b16 %v149
  %v852 = vunpack.c.l.b16 %v150
  %v853 = vunpack.c.h.b16 %v150
  %v854 = vunpack.c.l.b16 %v151
  %v855 = vunpack.c.h.b16 %v151
  %v856 = vunpack.c.l.b16 %v152
  %v857 = vunpack.c.h.b16 %v152
  %v858 = vunpack.c.l.b16 %v153
  %v859 = vunpack.c.h.b16 %v153
  %v860 = vunpack.c.l.b16 %v154
  %v861 = vunpack.c.h.b16 %v154
  %v862 = vunpack.c.l.b16 %v155
  %v863 = vunpack.c.h.b16 %v155
  %v864 = vunpack.c.l.b16 %v156
  %v865 = vunpack.c.h.b16 %v156
  %v866 = vunpack.c.l.b16 %v157
  %v867 = vunpack.c.h.b16 %v157
  %v868 = vunpack.c.l.b16 %v158
  %v869 = vunpack.c.h.b16 %v158
  %v870 = vunpack.c.l.b16 %v159
  %v871 = vunpack.c.h.b16 %v159
  %v872 = vunpack.c.l.b16 %v160
  %v873 = vunpack.c.h.b16 %v160
  %v874 = vunpack.c.l.b16 %v161
  %v875 = vunpack.c.h.b16 %v161
  %v876 = vunpack.c.l.b16 %v162
  %v877 = vunpack.c.h.b16 %v162
  %v878 = vunpack.c.l.b16 %v163
  %v879 = vunpack.c.h.b16 %v163
  %v880 = vunpack.c.l.b16 %v164
  %v881 = vunpack.c.h.b16 %v164
  %v882 = vunpack.c.l.b16 %v165
  %v883 = vunpack.c.h.b16 %v165
  %v884 = vunpack.c.l.b16 %v166
  %v885 = vunpack.c.h.b16 %v166
  %v886 = vunpack.c.l.b16 %v167
  %v887 = vunpack.c.h.b16 %v167
  %v888 = vunpack.c.l.b16 %v168
  %v889 = vunpack.c.h.b16 %v168
  %v890 = vunpack.c.l.b16 %v169
  %v891 = vunpack.c.h.b16 %v169
  %v892 = vunpack.c.l.b16 %v170
  %v893 = vunpack.c.h.b16 %v170
  %v894 = vunpack.c.l.b16 %v171
  %v895 = vunpack.c.h.b16 %v171
  %v896 = vunpack.c.l.b16 %v172
  %v897 = vunpack.c.h.b16 %v172
  %v898 = vunpack.c.l.b16 %v173
  %v899 = vunpack.c.h.b16 %v173
  %v900 = vunpack.c.l.b16 %v174
  %v901 = vunpack.c.h.b16 %v174
  %v902 = vunpack.c.l.b16 %v175
  %v903 = vunpack.c.h.b16 %v175
  %v904 = vunpack.c.l.b16 %v176
  %v905 = vunpack.c.h.b16 %v176
  %v906 = vunpack.c.l.b16 %v177
  %v907 = vunpack.c.h.b16 %v177
  %v908 = vunpack.c.l.b16 %v178
  %v909 = vunpack.c.h.b16 %v178
  %v910 = vunpack.c.l.b16 %v179
  %v911 = vunpack.c.h.b16 %v179
  %v912 = vunpack.c.l.b16 %v180
  %v913 = vunpack.c.h.b16 %v180
  %v914 = vunpack.c.l.b16 %v181
  %v915 = vunpack.c.h.b16 %v181
  %v916 = vunpack.c.l.b16 %v182
  %v917 = vunpack.c.h.b16 %v182
  %v918 = vunpack.c.l.b16 %v183
  %v919 = vunpack.c.h.b16 %v183
  %v920 = vunpack.c.l.b16 %v184
  %v921 = vunpack.c.h.b16 %v184
  %v922 = vunpack.c.l.b16 %v185
  %v923 = vunpack.c.h.b16 %v185
  %v924 = vunpack.c.l.b16 %v186
  %v925 = vunpack.c.h.b16 %v186
  %v926 = vunpack.c.l.b16 %v187
  %v927 = vunpack.c.h.b16 %v187
  %v928 = vunpack.c.l.b16 %v188
  %v929 = vunpack.c.h.b16 %v188
  %v930 = vunpack.c.l.b16 %v189
  %v931 = vunpack.c.h.b16 %v189
  %v932 = vunpack.c.l.b16 %v190
  %v933 = vunpack.c.h.b16 %v190
  %v934 = vunpack.c.l.b16 %v191
  %v935 = vunpack.c.h.b16 %v191
  %v936 = vunpack.c.l.b16 %v192
  %v937 = vunpack.c.h.b16 %v192
  %v938 = vunpack.c.l.b16 %v193
  %v939 = vunpack.c.h.b16 %v193
  %v940 = vunpack.c.l.b16 %v194
  %v941 = vunpack.c.h.b16 %v194
  %v942 = vunpack.c.l.b16 %v195
  %v943 = vunpack.c.h.b16 %v195
  %v944 = vunpack.c.l.b16 %v196
  %v945 = vunpack.c.h.b16 %v196
  %v946 = vunpack.c.l.b16 %v197
  %v947 = vunpack.c.h.b16 %v197
  %v948 = vunpack.c.l.b16 %v198
  %v949 = vunpack.c.h.b16 %v198
  %v950 = vunpack.c.l.b16 %v199
  %v951 = vunpack.c.h.b16 %v199
  %v952 = vunpack.c.l.b16 %v200
  %v953 = vunpack.c.h.b16 %v200
  %v954 = vunpack.c.l.b16 %v201
  %v955 = vunpack.c.h.b16 %v201
  %v956 = vunpack.c.l.b16 %v202
  %v957 = vunpack.c.h.b16 %v202
  %v958 = vunpack.c.l.b16 %v203
  %v959 = vunpack.c.h.b16 %v203
  %v960 = vunpack.c.l.b16 %v204
  %v961 = vunpack.c.h.b16 %v204
  %v962 = vunpack.c.l.b16 %v205
  %v963 = vunpack.c.h.b16 %v205
  %v964 = vunpack.c.l.b16 %v206
  %v965 = vunpack.c.h.b16 %v206
  %v966 = vunpack.c.l.b16 %v207
  %v967 = vunpack.c.h.b16 %v207
  %v968 = vunpack.c.l.b16 %v208
  %v969 = vunpack.c.h.b16 %v208
  %v970 = vunpack.c.l.b16 %v209
  %v971 = vunpack.c.h.b16 %v209
  %v972 = vunpack.c.l.b16 %v210
  %v973 = vunpack.c.h.b16 %v210
  %v974 = vunpack.c.l.b16 %v211
  %v975 = vunpack.c.h.b16 %v211
  %v976 = vunpack.c.l.b16 %v212
  %v977 = vunpack.c.h.b16 %v212
  %v978 = vunpack.c.l.b16 %v213
  %v979 = vunpack.c.h.b16 %v213
  %v980 = vunpack.c.l.b16 %v214
  %v981 = vunpack.c.h.b16 %v214
  %v982 = vunpack.c.l.b16 %v215
  %v983 = vunpack.c.h.b16 %v215
  %v984 = vunpack.c.l.b16 %v216
  %v985 = vunpack.c.h.b16 %v216
  %v986 = vunpack.c.l.b16 %v217
  %v987 = vunpack.c.h.b16 %v217
  %v988 = vunpack.c.l.b16 %v218
  %v989 = vunpack.c.h.b16 %v218
  %v990 = vunpack.c.l.b16 %v219
  %v991 = vunpack.c.h.b16 %v219
  %v992 = vunpack.c.l.b16 %v220
  %v993 = vunpack.c.h.b16 %v220
  %v994 = vunpack.c.l.b16 %v221
  %v995 = vunpack.c.h.b16 %v221
  %v996 = vunpack.c.l.b16 %v222
  %v997 = vunpack.c.h.b16 %v222
  %v998 = vunpack.c.l.b16 %v223
  %v999 = vunpack.c.h.b16 %v223
  %v1000 = vunpack.c.l.b16 %v224
  %v1001 = vunpack.c.h.b16 %v224
  %v1002 = vunpack.c.l.b16 %v225
  %v1003 = vunpack.c.h.b16 %v225
  %v1004 = vunpack.c.l.b16 %v226
  %v1005 = vunpack.c.h.b16 %v226
  %v1006 = vunpack.c.l.b16 %v227
  %v1007 = vunpack.c.h.b16 %v227
  %v1008 = vunpack.c.l.b16 %v228
  %v1009 = vunpack.c.h.b16 %v228
  %v1010 = vunpack.c.l.b16 %v229
  %v1011 = vunpack.c.h.b16 %v229
  %v1012 = vunpack.c.l.b16 %v230
  %v1013 = vunpack.c.h.b16 %v230
  %v1014 = vunpack.c.l.b16 %v231
  %v1015 = vunpack.c.h.b16 %v231
  %v1016 = vunpack.c.l.b16 %v232
  %v1017 = vunpack.c.h.b16 %v232
  %v1018 = vunpack.c.l.b16 %v233
  %v1019 = vunpack.c.h.b16 %v233
  %v1020 = vunpack.c.l.b16 %v234
  %v1021 = vunpack.c.h.b16 %v234
  %v1022 = vunpack.c.l.b16 %v235
  %v1023 = vunpack.c.h.b16 %v235
  %v1024 = vunpack.c.l.b16 %v236
  %v1025 = vunpack.c.h.b16 %v236
  %v1026 = vunpack.c.l.b16 %v237
  %v1027 = vunpack.c.h.b16 %v237
  %v1028 = vunpack.c.l.b16 %v238
  %v1029 = vunpack.c.h.b16 %v238
  %v1030 = vunpack.c.l.b16 %v239
  %v1031 = vunpack.c.h.b16 %v239
  %v1032 = vunpack.c.l.b16 %v240
  %v1033 = vunpack.c.h.b16 %v240
  %v1034 = vunpack.c.l.b16 %v241
  %v1035 = vunpack.c.h.b16 %v241
  %v1036 = vunpack.c.l.b16 %v242
  %v1037 = vunpack.c.h.b16 %v242
  %v1038 = vunpack.c.l.b16 %v243
  %v1039 = vunpack.c.h.b16 %v243
  %v1040 = vunpack.c.l.b16 %v244
  %v1041 = vunpack.c.h.b16 %v244
  %v1042 = vunpack.c.l.b16 %v245
  %v1043 = vunpack.c.h.b16 %v245
  %v1044 = vunpack.c.l.b16 %v246
  %v1045 = vunpack.c.h.b16 %v246
  %v1046 = vunpack.c.l.b16 %v247
  %v1047 = vunpack.c.h.b16 %v247
  %v1048 = vunpack.c.l.b16 %v248
  %v1049 = vunpack.c.h.b16 %v248
  %v1050 = vunpack.c.l.b16 %v249
  %v1051 = vunpack.c.h.b16 %v249
  %v1052 = vunpack.c.l.b16 %v250
  %v1053 = vunpack.c.h.b16 %v250
  %v1054 = vunpack.c.l.b16 %v251
  %v1055 = vunpack.c.h.b16 %v251
  %v1056 = vunpack.c.l.b16 %v252
  %v1057 = vunpack.c.h.b16 %v252
  %v1058 = vunpack.c.l.b16 %v253
  %v1059 = vunpack.c.h.b16 %v253
  %v1060 = vunpack.c.l.b16 %v254
  %v1061 = vunpack.c.h.b16 %v254
  %v1062 = vunpack.c.l.b16 %v255
  %v1063 = vunpack.c.h.b16 %v255
  %v1064 = vunpack.c.l.b16 %v256
  %v1065 = vunpack.c.h.b16 %v256
  %v1066 = vunpack.c.l.b16 %v257
  %v1067 = vunpack.c.h.b16 %v257
  %v1068 = vunpack.c.l.b16 %v258
  %v1069 = vunpack.c.h.b16 %v258
  %v1070 = vunpack.c.l.b16 %v259
  %v1071 = vunpack.c.h.b16 %v259
  %v1072 = vunpack.c.l.b16 %v260
  %v1073 = vunpack.c.h.b16 %v260
  %v1074 = vunpack.c.l.b16 %v261
  %v1075 = vunpack.c.h.b16 %v261
  %v1076 = vunpack.c.l.b16 %v262
  %v1077 = vunpack.c.h.b16 %v262
  %v1078 = vunpack.c.l.b16 %v263
  %v1079 = vunpack.c.h.b16 %v263
  %v1080 = vunpack.c.l.b16 %v264
  %v1081 = vunpack.c.h.b16 %v264
  %v1082 = vunpack.c.l.b16 %v265
  %v1083 = vunpack.c.h.b16 %v265
  %v1084 = vunpack.c.l.b16 %v266
  %v1085 = vunpack.c.h.b16 %v266
  %v1086 = vunpack.c.l.b16 %v267
  %v1087 = vunpack.c.h.b16 %v267
  %v1088 = vunpack.c.l.b16 %v268
  %v1089 = vunpack.c.h.b16 %v268
  %v1090 = vunpack.c.l.b16 %v269
  %v1091 = vunpack.c.h.b16 %v269
  %v1092 = vunpack.c.l.b16 %v270
  %v1093 = vunpack.c.h.b16 %v270
  %v1094 = vunpack.c.l.b16 %v271
  %v1095 = vunpack.c.h.b16 %v271
  %v1096 = vunpack.c.l.b16 %v272
  %v1097 = vunpack.c.h.b16 %v272
  %v1098 = vunpack.c.l.b16 %v273
  %v1099 = vunpack.c.h.b16 %v273
  %v1100 = vunpack.c.l.b16 %v274
  %v1101 = vunpack.c.h.b16 %v274
  %v1102 = vunpack.c.l.b16 %v275
  %v1103 = vunpack.c.h.b16 %v275
  %v1104 = vunpack.c.l.b16 %v276
  %v1105 = vunpack.c.h.b16 %v276
  %v1106 = vunpack.c.l.b16 %v277
  %v1107 = vunpack.c.h.b16 %v277
  %v1108 = vunpack.c.l.b16 %v278
  %v1109 = vunpack.c.h.b16 %v278
  %v1110 = vunpack.c.l.b16 %v279
  %v1111 = vunpack.c.h.b16 %v279
  %v1112 = vunpack.c.l.b16 %v280
  %v1113 = vunpack.c.h.b16 %v280
  %v1114 = vunpack.c.l.b16 %v281
  %v1115 = vunpack.c.h.b16 %v281
  %v1116 = vunpack.c.l.b16 %v282
  %v1117 = vunpack.c.h.b16 %v282
  %v1118 = vunpack.c.l.b16 %v283
  %v1119 = vunpack.c.h.b16 %v283
  %v1120 = vunpack.c.l.b16 %v284
  %v1121 = vunpack.c.h.b16 %v284
  %v1122 = vunpack.c.l.b16 %v285
  %v1123 = vunpack.c.h.b16 %v285
  %v1124 = vunpack.c.l.b16 %v286
  %v1125 = vunpack.c.h.b16 %v286
  %v1126 = vunpack.c.l.b16 %v287
  %v1127 = vunpack.c.h.b16 %v287
  %v1128 = vunpack.c.l.b16 %v288
  %v1129 = vunpack.c.h.b16 %v288
  %v1130 = vunpack.c.l.b16 %v289
  %v1131 = vunpack.c.h.b16 %v289
  %v1132 = vunpack.c.l.b16 %v290
  %v1133 = vunpack.c.h.b16 %v290
  %v1134 = vunpack.c.l.b16 %v291
  %v1135 = vunpack.c.h.b16 %v291
  %v1136 = vunpack.c.l.b16 %v292
  %v1137 = vunpack.c.h.b16 %v292
  %v1138 = vunpack.c.l.b16 %v293
  %v1139 = vunpack.c.h.b16 %v293
  %v1140 = vunpack.c.l.b16 %v294
  %v1141 = vunpack.c.h.b16 %v294
  %v1142 = vunpack.c.l.b16 %v295
  %v1143 = vunpack.c.h.b16 %v295
  %v1144 = vpack.c.b16 %v636, %v632
  %v1145 = vpack.c.b16 %v637, %v633
  %v1146 = vpack.c.b16 %v638, %v634
  %v1147 = vpack.c.b16 %v639, %v635
  %v1148 = vpack.c.b16 %v644, %v640
  %v1149 = vpack.c.b16 %v645, %v641
  %v1150 = vpack.c.b16 %v646, %v642
  %v1151 = vpack.c.b16 %v647, %v643
  %v1152 = vpack.c.b16 %v652, %v648
  %v1153 = vpack.c.b16 %v653, %v649
  %v1154 = vpack.c.b16 %v654, %v650
  %v1155 = vpack.c.b16 %v655, %v651
  %v1156 = vpack.c.b16 %v660, %v656
  %v1157 = vpack.c.b16 %v661, %v657
  %v1158 = vpack.c.b16 %v662, %v658
  %v1159 = vpack.c.b16 %v663, %v659
  %v1160 = vpack.c.b16 %v668, %v664
  %v1161 = vpack.c.b16 %v669, %v665
  %v1162 = vpack.c.b16 %v670, %v666
  %v1163 = vpack.c.b16 %v671, %v667
  %v1164 = vpack.c.b16 %v676, %v672
  %v1165 = vpack.c.b16 %v677, %v673
  %v1166 = vpack.c.b16 %v678, %v674
  %v1167 = vpack.c.b16 %v679, %v675
  %v1168 = vpack.c.b16 %v684, %v680
  %v1169 = vpack.c.b16 %v685, %v681
  %v1170 = vpack.c.b16 %v686, %v682
  %v1171 = vpack.c.b16 %v687, %v683
  %v1172 = vpack.c.b16 %v692, %v688
  %v1173 = vpack.c.b16 %v693, %v689
  %v1174 = vpack.c.b16 %v694, %v690
  %v1175 = vpack.c.b16 %v695, %v691
  %v1176 = vpack.c.b16 %v700, %v696
  %v1177 = vpack.c.b16 %v701, %v697
  %v1178 = vpack.c.b16 %v702, %v698
  %v1179 = vpack.c.b16 %v703, %v699
  %v1180 = vpack.c.b16 %v708, %v704
  %v1181 = vpack.c.b16 %v709, %v705
  %v1182 = vpack.c.b16 %v710, %v706
  %v1183 = vpack.c.b16 %v711, %v707
  %v1184 = vpack.c.b16 %v716, %v712
  %v1185 = vpack.c.b16 %v717, %v713
  %v1186 = vpack.c.b16 %v718, %v714
  %v1187 = vpack.c.b16 %v719, %v715
  %v1188 = vpack.c.b16 %v724, %v720
  %v1189 = vpack.c.b16 %v725, %v721
  %v1190 = vpack.c.b16 %v726, %v722
  %v1191 = vpack.c.b16 %v727, %v723
  %v1192 = vpack.c.b16 %v732, %v728
  %v1193 = vpack.c.b16 %v733, %v729
  %v1194 = vpack.c.b16 %v734, %v730
  %v1195 = vpack.c.b16 %v735, %v731
  %v1196 = vpack.c.b16 %v740, %v736
  %v1197 = vpack.c.b16 %v741, %v737
  %v1198 = vpack.c.b16 %v742, %v738
  %v1199 = vpack.c.b16 %v743, %v739
  %v1200 = vpack.c.b16 %v748, %v744
  %v1201 = vpack.c.b16 %v749, %v745
  %v1202 = vpack.c.b16 %v750, %v746
  %v1203 = vpack.c.b16 %v751, %v747
  %v1204 = vpack.c.b16 %v756, %v752
  %v1205 = vpack.c.b16 %v757, %v753
  %v1206 = vpack.c.b16 %v758, %v754
  %v1207 = vpack.c.b16 %v759, %v755
  %v1208 = vpack.c.b16 %v764, %v760
  %v1209 = vpack.c.b16 %v765, %v761
  %v1210 = vpack.c.b16 %v766, %v762
  %v1211 = vpack.c.b16 %v767, %v763
  %v1212 = vpack.c.b16 %v772, %v768
  %v1213 = vpack.c.b16 %v773, %v769
  %v1214 = vpack.c.b16 %v774, %v770
  %v1215 = vpack.c.b16 %v775, %v771
  %v1216 = vpack.c.b16 %v780, %v776
  %v1217 = vpack.c.b16 %v781, %v777
  %v1218 = vpack.c.b16 %v782, %v778
  %v1219 = vpack.c.b16 %v783, %v779
  %v1220 = vpack.c.b16 %v788, %v784
  %v1221 = vpack.c.b16 %v789, %v785
  %v1222 = vpack.c.b16 %v790, %v786
  %v1223 = vpack.c.b16 %v791, %v787
  %v1224 = vpack.c.b16 %v796, %v792
  %v1225 = vpack.c.b16 %v797, %v793
  %v1226 = vpack.c.b16 %v798, %v794
  %v1227 = vpack.c.b16 %v799, %v795
  %v1228 = vpack.c.b16 %v804, %v800
  %v1229 = vpack.c.b16 %v805, %v801
  %v1230 = vpack.c.b16 %v806, %v802
  %v1231 = vpack.c.b16 %v807, %v803
  %v1232 = vpack.c.b16 %v812, %v808
  %v1233 = vpack.c.b16 %v813, %v809
  %v1234 = vpack.c.b16 %v814, %v810
  %v1235 = vpack.c.b16 %v815, %v811
  %v1236 = vpack.c.b16 %v820, %v816
  %v1237 = vpack.c.b16 %v821, %v817
  %v1238 = vpack.c.b16 %v822, %v818
  %v1239 = vpack.c.b16 %v823, %v819
  %v1240 = vpack.c.b16 %v828, %v824
  %v1241 = vpack.c.b16 %v829, %v825
  %v1242 = vpack.c.b16 %v830, %v826
  %v1243 = vpack.c.b16 %v831, %v827
  %v1244 = vpack.c.b16 %v836, %v832
  %v1245 = vpack.c.b16 %v837, %v833
  %v1246 = vpack.c.b16 %v838, %v834
  %v1247 = vpack.c.b16 %v839, %v835
  %v1248 = vpack.c.b16 %v844, %v840
  %v1249 = vpack.c.b16 %v845, %v841
  %v1250 = vpack.c.b16 %v846, %v842
  %v1251 = vpack.c.b16 %v847, %v843
  %v1252 = vpack.c.b16 %v852, %v848
  %v1253 = vpack.c.b16 %v853, %v849
  %v1254 = vpack.c.b16 %v854, %v850
  %v1255 = vpack.c.b16 %v855, %v851
  %v1256 = vpack.c.b16 %v860, %v856
  %v1257 = vpack.c.b16 %v861, %v857
  %v1258 = vpack.c.b16 %v862, %v858
  %v1259 = vpack.c.b16 %v863, %v859
  %v1260 = vpack.c.b16 %v868, %v864
  %v1261 = vpack.c.b16 %v869, %v865
  %v1262 = vpack.c.b16 %v870, %v866
  %v1263 = vpack.c.b16 %v871, %v867
  %v1264 = vpack.c.b16 %v876, %v872
  %v1265 = vpack.c.b16 %v877, %v873
  %v1266 = vpack.c.b16 %v878, %v874
  %v1267 = vpack.c.b16 %v879, %v875
  %v1268 = vpack.c.b16 %v884, %v880
  %v1269 = vpack.c.b16 %v885, %v881
  %v1270 = vpack.c.b16 %v886, %v882
  %v1271 = vpack.c.b16 %v887, %v883
  %v1272 = vpack.c.b16 %v892, %v888
  %v1273 = vpack.c.b16 %v893, %v889
  %v1274 = vpack.c.b16 %v894, %v890
  %v1275 = vpack.c.b16 %v895, %v891
  %v1276 = vpack.c.b16 %v900, %v896
  %v1277 = vpack.c.b16 %v901, %v897
  %v1278 = vpack.c.b16 %v902, %v898
  %v1279 = vpack.c.b16 %v903, %v899
  %v1280 = vpack.c.b16 %v908, %v904
  %v1281 = vpack.c.b16 %v909, %v905
  %v1282 = vpack.c.b16 %v910, %v906
  %v1283 = vpack.c.b16 %v911, %v907
  %v1284 = vpack.c.b16 %v916, %v912
  %v1285 = vpack.c.b16 %v917, %v913
  %v1286 = vpack.c.b16 %v918, %v914
  %v1287 = vpack.c.b16 %v919, %v915
  %v1288 = vpack.c.b16 %v924, %v920
  %v1289 = vpack.c.b16 %v925, %v921
  %v1290 = vpack.c.b16 %v926, %v922
  %v1291 = vpack.c.b16 %v927, %v923
  %v1292 = vpack.c.b16 %v932, %v928
  %v1293 = vpack.c.b16 %v933, %v929
  %v1294 = vpack.c.b16 %v934, %v930
  %v1295 = vpack.c.b16 %v935, %v931
  %v1296 = vpack.c.b16 %v940, %v936
  %v1297 = vpack.c.b16 %v941, %v937
  %v1298 = vpack.c.b16 %v942, %v938
  %v1299 = vpack.c.b16 %v943, %v939
  %v1300 = vpack.c.b16 %v948, %v944
  %v1301 = vpack.c.b16 %v949, %v945
  %v1302 = vpack.c.b16 %v950, %v946
  %v1303 = vpack.c.b16 %v951, %v947
  %v1304 = vpack.c.b16 %v956, %v952
  %v1305 = vpack.c.b16 %v957, %v953
  %v1306 = vpack.c.b16 %v958, %v954
  %v1307 = vpack.c.b16 %v959, %v955
  %v1308 = vpack.c.b16 %v964, %v960
  %v1309 = vpack.c.b16 %v965, %v961
  %v1310 = vpack.c.b16 %v966, %v962
  %v1311 = vpack.c.b16 %v967, %v963
  %v1312 = vpack.c.b16 %v972, %v968
  %v1313 = vpack.c.b16 %v973, %v969
  %v1314 = vpack.c.b16 %v974, %v970
  %v1315 = vpack.c.b16 %v975, %v971
  %v1316 = vpack.c.b16 %v980, %v976
  %v1317 = vpack.c.b16 %v981, %v977
  %v1318 = vpack.c.b16 %v982, %v978
  %v1319 = vpack.c.b16 %v983, %v979
  %v1320 = vpack.c.b16 %v988, %v984
  %v1321 = vpack.c.b16 %v989, %v985
  %v1322 = vpack.c.b16 %v990, %v986
  %v1323 = vpack.c.b16 %v991, %v987
  %v1324 = vpack.c.b16 %v996, %v992
  %v1325 = vpack.c.b16 %v997, %v993
  %v1326 = vpack.c.b16 %v998, %v994
  %v1327 = vpack.c.b16 %v999, %v995
  %v1328 = vpack.c.b16 %v1004, %v1000
  %v1329 = vpack.c.b16 %v1005, %v1001
  %v1330 = vpack.c.b16 %v1006, %v1002
  %v1331 = vpack.c.b16 %v1007, %v1003
  %v1332 = vpack.c.b16 %v1012, %v1008
  %v1333 = vpack.c.b16 %v1013, %v1009
  %v1334 = vpack.c.b16 %v1014, %v1010
  %v1335 = vpack.c.b16 %v1015, %v1011
  %v1336 = vpack.c.b16 %v1020, %v1016
  %v1337 = vpack.c.b16 %v1021, %v1017
  %v1338 = vpack.c.b16 %v1022, %v1018
  %v1339 = vpack.c.b16 %v1023, %v1019
  %v1340 = vpack.c.b16 %v1028, %v1024
  %v1341 = vpack.c.b16 %v1029, %v1025
  %v1342 = vpack.c.b16 %v1030, %v1026
  %v1343 = vpack.c.b16 %v1031, %v1027
  %v1344 = vpack.c.b16 %v1036, %v1032
  %v1345 = vpack.c.b16 %v1037, %v1033
  %v1346 = vpack.c.b16 %v1038, %v1034
  %v1347 = vpack.c.b16 %v1039, %v1035
  %v1348 = vpack.c.b16 %v1044, %v1040
  %v1349 = vpack.c.b16 %v1045, %v1041
  %v1350 = vpack.c.b16 %v1046, %v1042
  %v1351 = vpack.c.b16 %v1047, %v1043
  %v1352 = vpack.c.b16 %v1052, %v1048
  %v1353 = vpack.c.b16 %v1053, %v1049
  %v1354 = vpack.c.b16 %v1054, %v1050
  %v1355 = vpack.c.b16 %v1055, %v1051
  %v1356 = vpack.c.b16 %v1060, %v1056
  %v1357 = vpack.c.b16 %v1061, %v1057
  %v1358 = vpack.c.b16 %v1062, %v1058
  %v1359 = vpack.c.b16 %v1063, %v1059
  %v1360 = vpack.c.b16 %v1068, %v1064
  %v1361 = vpack.c.b16 %v1069, %v1065
  %v1362 = vpack.c.b16 %v1070, %v1066
  %v1363 = vpack.c.b16 %v1071, %v1067
  %v1364 = vpack.c.b16 %v1076, %v1072
  %v1365 = vpack.c.b16 %v1077, %v1073
  %v1366 = vpack.c.b16 %v1078, %v1074
  %v1367 = vpack.c.b16 %v1079, %v1075
  %v1368 = vpack.c.b16 %v1084, %v1080
  %v1369 = vpack.c.b16 %v1085, %v1081
  %v1370 = vpack.c.b16 %v1086, %v1082
  %v1371 = vpack.c.b16 %v1087, %v1083
  %v1372 = vpack.c.b16 %v1092, %v1088
  %v1373 = vpack.c.b16 %v1093, %v1089
  %v1374 = vpack.c.b16 %v1094, %v1090
  %v1375 = vpack.c.b16 %v1095, %v1091
  %v1376 = vpack.c.b16 %v1100, %v1096
  %v1377 = vpack.c.b16 %v1101, %v1097
  %v1378 = vpack.c.b16 %v1102, %v1098
  %v1379 = vpack.c.b16 %v1103, %v1099
  %v1380 = vpack.c.b16 %v1108, %v1104
  %v1381 = vpack.c.b16 %v1109, %v1105
  %v1382 = vpack.c.b16 %v1110, %v1106
  %v1383 = vpack.c.b16 %v1111, %v1107
  %v1384 = vpack.c.b16 %v1116, %v1112
  %v1385 = vpack.c.b16 %v1117, %v1113
  %v1386 = vpack.c.b16 %v1118, %v1114
  %v1387 = vpack.c.b16 %v1119, %v1115
  %v1388 = vpack.c.b16 %v1124, %v1120
  %v1389 = vpack.c.b16 %v1125, %v1121
  %v1390 = vpack.c.b16 %v1126, %v1122
  %v1391 = vpack.c.b16 %v1127, %v1123
  %v1392 = vpack.c.b16 %v1132, %v1128
  %v1393 = vpack.c.b16 %v1133, %v1129
  %v1394 = vpack.c.b16 %v1134, %v1130
  %v1395 = vpack.c.b16 %v1135, %v1131
  %v1396 = vpack.c.b16 %v1140, %v1136
  %v1397 = vpack.c.b16 %v1141, %v1137
  %v1398 = vpack.c.b16 %v1142, %v1138
  %v1399 = vpack.c.b16 %v1143, %v1139
  %1656 = vmatprep.subr.bf16.mxu0 %v1145
  %1657 = vmatpush1.bf16.msra.mxu0 %v1144
  %1658 = vmatprep.subr.bf16.mxu0 %v1149
  %1659 = vmatpush1.bf16.msra.mxu0 %v1148
  %1660 = vmatprep.subr.bf16.mxu0 %v1153
  %1661 = vmatpush1.bf16.msra.mxu0 %v1152
  %1662 = vmatprep.subr.bf16.mxu0 %v1157
  %1663 = vmatpush1.bf16.msra.mxu0 %v1156
  %1664 = vmatprep.subr.bf16.mxu0 %v1161
  %1665 = vmatpush1.bf16.msra.mxu0 %v1160
  %1666 = vmatprep.subr.bf16.mxu0 %v1165
  %1667 = vmatpush1.bf16.msra.mxu0 %v1164
  %1668 = vmatprep.subr.bf16.mxu0 %v1169
  %1669 = vmatpush1.bf16.msra.mxu0 %v1168
  %1670 = vmatprep.subr.bf16.mxu0 %v1173
  %1671 = vmatpush1.bf16.msra.mxu0 %v1172
  %1672 = vmatprep.subr.bf16.mxu0 %v1177
  %1673 = vmatpush1.bf16.msra.mxu0 %v1176
  %1674 = vmatprep.subr.bf16.mxu0 %v1181
  %1675 = vmatpush1.bf16.msra.mxu0 %v1180
  %1676 = vmatprep.subr.bf16.mxu0 %v1185
  %1677 = vmatpush1.bf16.msra.mxu0 %v1184
  %1678 = vmatprep.subr.bf16.mxu0 %v1189
  %1679 = vmatpush1.bf16.msra.mxu0 %v1188
  %1680 = vmatprep.subr.bf16.mxu0 %v1193
  %1681 = vmatpush1.bf16.msra.mxu0 %v1192
  %1682 = vmatprep.subr.bf16.mxu0 %v1197
  %1683 = vmatpush1.bf16.msra.mxu0 %v1196
  %1684 = vmatprep.subr.bf16.mxu0 %v1201
  %1685 = vmatpush1.bf16.msra.mxu0 %v1200
  %1686 = vmatprep.subr.bf16.mxu0 %v1205
  %1687 = vmatpush1.bf16.msra.mxu0 %v1204
  %1688 = vmatprep.mubr.bf16.mxu0 %v356
  %1689 = vmatmul.mubr.bf16.gmra.mrb[0].mxu0 %v342
  %v1690 = vpop.f32.mrb[0].mxu0
  %v1691 = vadd.f32 %v301, %v1690
  %v1692 = vpop.f32.mrb[0].mxu0
  %v1693 = vadd.f32 %v305, %v1692
  %v1694 = vpop.f32.mrb[0].mxu0
  %v1695 = vpop.f32.mrb[0].mxu0
  %1696 = vdwg.mxu0
  %1697 = vmatprep.subr.bf16.mxu0 %v1209
  %1698 = vmatpush1.bf16.msra.mxu0 %v1208
  %1699 = vmatprep.subr.bf16.mxu0 %v1213
  %1700 = vmatpush1.bf16.msra.mxu0 %v1212
  %1701 = vmatprep.subr.bf16.mxu0 %v1217
  %1702 = vmatpush1.bf16.msra.mxu0 %v1216
  %1703 = vmatprep.subr.bf16.mxu0 %v1221
  %1704 = vmatpush1.bf16.msra.mxu0 %v1220
  %1705 = vmatprep.subr.bf16.mxu0 %v1225
  %1706 = vmatpush1.bf16.msra.mxu0 %v1224
  %1707 = vmatprep.subr.bf16.mxu0 %v1229
  %1708 = vmatpush1.bf16.msra.mxu0 %v1228
  %1709 = vmatprep.subr.bf16.mxu0 %v1233
  %1710 = vmatpush1.bf16.msra.mxu0 %v1232
  %1711 = vmatprep.subr.bf16.mxu0 %v1237
  %1712 = vmatpush1.bf16.msra.mxu0 %v1236
  %1713 = vmatprep.subr.bf16.mxu0 %v1241
  %1714 = vmatpush1.bf16.msra.mxu0 %v1240
  %1715 = vmatprep.subr.bf16.mxu0 %v1245
  %1716 = vmatpush1.bf16.msra.mxu0 %v1244
  %1717 = vmatprep.subr.bf16.mxu0 %v1249
  %1718 = vmatpush1.bf16.msra.mxu0 %v1248
  %1719 = vmatprep.subr.bf16.mxu0 %v1253
  %1720 = vmatpush1.bf16.msra.mxu0 %v1252
  %1721 = vmatprep.subr.bf16.mxu0 %v1257
  %1722 = vmatpush1.bf16.msra.mxu0 %v1256
  %1723 = vmatprep.subr.bf16.mxu0 %v1261
  %1724 = vmatpush1.bf16.msra.mxu0 %v1260
  %1725 = vmatprep.subr.bf16.mxu0 %v1265
  %1726 = vmatpush1.bf16.msra.mxu0 %v1264
  %1727 = vmatprep.subr.bf16.mxu0 %v1269
  %1728 = vmatpush1.bf16.msra.mxu0 %v1268
  %1729 = vmatprep.mubr.bf16.mxu0 %v366
  %1730 = vmatmul.mubr.bf16.gmra.mrb[0].mxu0 %v364
  %v1731 = vpop.f32.mrb[0].mxu0
  %v1732 = vadd.f32 %v1691, %v1731
  %v1733 = vpop.f32.mrb[0].mxu0
  %v1734 = vadd.f32 %v1693, %v1733
  %v1735 = vpop.f32.mrb[0].mxu0
  %v1736 = vpop.f32.mrb[0].mxu0
  %1737 = vdwg.mxu0
  %1738 = vmatprep.subr.bf16.mxu0 %v1273
  %1739 = vmatpush1.bf16.msra.mxu0 %v1272
  %1740 = vmatprep.subr.bf16.mxu0 %v1277
  %1741 = vmatpush1.bf16.msra.mxu0 %v1276
  %1742 = vmatprep.subr.bf16.mxu0 %v1281
  %1743 = vmatpush1.bf16.msra.mxu0 %v1280
  %1744 = vmatprep.subr.bf16.mxu0 %v1285
  %1745 = vmatpush1.bf16.msra.mxu0 %v1284
  %1746 = vmatprep.subr.bf16.mxu0 %v1289
  %1747 = vmatpush1.bf16.msra.mxu0 %v1288
  %1748 = vmatprep.subr.bf16.mxu0 %v1293
  %1749 = vmatpush1.bf16.msra.mxu0 %v1292
  %1750 = vmatprep.subr.bf16.mxu0 %v1297
  %1751 = vmatpush1.bf16.msra.mxu0 %v1296
  %1752 = vmatprep.subr.bf16.mxu0 %v1301
  %1753 = vmatpush1.bf16.msra.mxu0 %v1300
  %1754 = vmatprep.subr.bf16.mxu0 %v1305
  %1755 = vmatpush1.bf16.msra.mxu0 %v1304
  %1756 = vmatprep.subr.bf16.mxu0 %v1309
  %1757 = vmatpush1.bf16.msra.mxu0 %v1308
  %1758 = vmatprep.subr.bf16.mxu0 %v1313
  %1759 = vmatpush1.bf16.msra.mxu0 %v1312
  %1760 = vmatprep.subr.bf16.mxu0 %v1317
  %1761 = vmatpush1.bf16.msra.mxu0 %v1316
  %1762 = vmatprep.subr.bf16.mxu0 %v1321
  %1763 = vmatpush1.bf16.msra.mxu0 %v1320
  %1764 = vmatprep.subr.bf16.mxu0 %v1325
  %1765 = vmatpush1.bf16.msra.mxu0 %v1324
  %1766 = vmatprep.subr.bf16.mxu0 %v1329
  %1767 = vmatpush1.bf16.msra.mxu0 %v1328
  %1768 = vmatprep.subr.bf16.mxu0 %v1333
  %1769 = vmatpush1.bf16.msra.mxu0 %v1332
  %1770 = vmatprep.mubr.bf16.mxu0 %v363
  %1771 = vmatmul.mubr.bf16.gmra.mrb[0].mxu0 %v349
  %v1772 = vpop.f32.mrb[0].mxu0
  %v1773 = vadd.f32 %v1732, %v1772
  %v1774 = vpop.f32.mrb[0].mxu0
  %v1775 = vadd.f32 %v1734, %v1774
  %v1776 = vpop.f32.mrb[0].mxu0
  %v1777 = vpop.f32.mrb[0].mxu0
  %1778 = vdwg.mxu0
  %1779 = vmatprep.subr.bf16.mxu0 %v1337
  %1780 = vmatpush1.bf16.msra.mxu0 %v1336
  %1781 = vmatprep.subr.bf16.mxu0 %v1341
  %1782 = vmatpush1.bf16.msra.mxu0 %v1340
  %1783 = vmatprep.subr.bf16.mxu0 %v1345
  %1784 = vmatpush1.bf16.msra.mxu0 %v1344
  %1785 = vmatprep.subr.bf16.mxu0 %v1349
  %1786 = vmatpush1.bf16.msra.mxu0 %v1348
  %1787 = vmatprep.subr.bf16.mxu0 %v1353
  %1788 = vmatpush1.bf16.msra.mxu0 %v1352
  %1789 = vmatprep.subr.bf16.mxu0 %v1357
  %1790 = vmatpush1.bf16.msra.mxu0 %v1356
  %1791 = vmatprep.subr.bf16.mxu0 %v1361
  %1792 = vmatpush1.bf16.msra.mxu0 %v1360
  %1793 = vmatprep.subr.bf16.mxu0 %v1365
  %1794 = vmatpush1.bf16.msra.mxu0 %v1364
  %1795 = vmatprep.subr.bf16.mxu0 %v1369
  %1796 = vmatpush1.bf16.msra.mxu0 %v1368
  %1797 = vmatprep.subr.bf16.mxu0 %v1373
  %1798 = vmatpush1.bf16.msra.mxu0 %v1372
  %1799 = vmatprep.subr.bf16.mxu0 %v1377
  %1800 = vmatpush1.bf16.msra.mxu0 %v1376
  %1801 = vmatprep.subr.bf16.mxu0 %v1381
  %1802 = vmatpush1.bf16.msra.mxu0 %v1380
  %1803 = vmatprep.subr.bf16.mxu0 %v1385
  %1804 = vmatpush1.bf16.msra.mxu0 %v1384
  %1805 = vmatprep.subr.bf16.mxu0 %v1389
  %1806 = vmatpush1.bf16.msra.mxu0 %v1388
  %1807 = vmatprep.subr.bf16.mxu0 %v1393
  %1808 = vmatpush1.bf16.msra.mxu0 %v1392
  %1809 = vmatprep.subr.bf16.mxu0 %v1397
  %1810 = vmatpush1.bf16.msra.mxu0 %v1396
  %1811 = vmatprep.mubr.bf16.mxu0 %v367
  %1812 = vmatmul.mubr.bf16.gmra.mrb[0].mxu0 %v365
  %v1813 = vpop.f32.mrb[0].mxu0
  %v1814 = vadd.f32 %v1773, %v1813
  %v1815 = vpop.f32.mrb[0].mxu0
  %v1816 = vadd.f32 %v1775, %v1815
  %v1817 = vpop.f32.mrb[0].mxu0
  %v1818 = vpop.f32.mrb[0].mxu0
  %1819 = vdwg.mxu0
  %1820 = vmatprep.subr.bf16.mxu0 %v1147
  %1821 = vmatpush1.bf16.msra.mxu0 %v1146
  %1822 = vmatprep.subr.bf16.mxu0 %v1151
  %1823 = vmatpush1.bf16.msra.mxu0 %v1150
  %1824 = vmatprep.subr.bf16.mxu0 %v1155
  %1825 = vmatpush1.bf16.msra.mxu0 %v1154
  %1826 = vmatprep.subr.bf16.mxu0 %v1159
  %1827 = vmatpush1.bf16.msra.mxu0 %v1158
  %1828 = vmatprep.subr.bf16.mxu0 %v1163
  %1829 = vmatpush1.bf16.msra.mxu0 %v1162
  %1830 = vmatprep.subr.bf16.mxu0 %v1167
  %1831 = vmatpush1.bf16.msra.mxu0 %v1166
  %1832 = vmatprep.subr.bf16.mxu0 %v1171
  %1833 = vmatpush1.bf16.msra.mxu0 %v1170
  %1834 = vmatprep.subr.bf16.mxu0 %v1175
  %1835 = vmatpush1.bf16.msra.mxu0 %v1174
  %1836 = vmatprep.subr.bf16.mxu0 %v1179
  %1837 = vmatpush1.bf16.msra.mxu0 %v1178
  %1838 = vmatprep.subr.bf16.mxu0 %v1183
  %1839 = vmatpush1.bf16.msra.mxu0 %v1182
  %1840 = vmatprep.subr.bf16.mxu0 %v1187
  %1841 = vmatpush1.bf16.msra.mxu0 %v1186
  %1842 = vmatprep.subr.bf16.mxu0 %v1191
  %1843 = vmatpush1.bf16.msra.mxu0 %v1190
  %1844 = vmatprep.subr.bf16.mxu0 %v1195
  %1845 = vmatpush1.bf16.msra.mxu0 %v1194
  %1846 = vmatprep.subr.bf16.mxu0 %v1199
  %1847 = vmatpush1.bf16.msra.mxu0 %v1198
  %1848 = vmatprep.subr.bf16.mxu0 %v1203
  %1849 = vmatpush1.bf16.msra.mxu0 %v1202
  %1850 = vmatprep.subr.bf16.mxu0 %v1207
  %1851 = vmatpush1.bf16.msra.mxu0 %v1206
  %1852 = vmatprep.mubr.bf16.mxu0 %v356
  %1853 = vmatmul.mubr.bf16.gmra.mrb[0].mxu0 %v342
  %v1854 = vpop.f32.mrb[0].mxu0
  %v1855 = vadd.f32 %v309, %v1854
  %v1856 = vpop.f32.mrb[0].mxu0
  %v1857 = vadd.f32 %v313, %v1856
  %v1858 = vpop.f32.mrb[0].mxu0
  %v1859 = vpop.f32.mrb[0].mxu0
  %1860 = vdwg.mxu0
  %1861 = vmatprep.subr.bf16.mxu0 %v1211
  %1862 = vmatpush1.bf16.msra.mxu0 %v1210
  %1863 = vmatprep.subr.bf16.mxu0 %v1215
  %1864 = vmatpush1.bf16.msra.mxu0 %v1214
  %1865 = vmatprep.subr.bf16.mxu0 %v1219
  %1866 = vmatpush1.bf16.msra.mxu0 %v1218
  %1867 = vmatprep.subr.bf16.mxu0 %v1223
  %1868 = vmatpush1.bf16.msra.mxu0 %v1222
  %1869 = vmatprep.subr.bf16.mxu0 %v1227
  %1870 = vmatpush1.bf16.msra.mxu0 %v1226
  %1871 = vmatprep.subr.bf16.mxu0 %v1231
  %1872 = vmatpush1.bf16.msra.mxu0 %v1230
  %1873 = vmatprep.subr.bf16.mxu0 %v1235
  %1874 = vmatpush1.bf16.msra.mxu0 %v1234
  %1875 = vmatprep.subr.bf16.mxu0 %v1239
  %1876 = vmatpush1.bf16.msra.mxu0 %v1238
  %1877 = vmatprep.subr.bf16.mxu0 %v1243
  %1878 = vmatpush1.bf16.msra.mxu0 %v1242
  %1879 = vmatprep.subr.bf16.mxu0 %v1247
  %1880 = vmatpush1.bf16.msra.mxu0 %v1246
  %1881 = vmatprep.subr.bf16.mxu0 %v1251
  %1882 = vmatpush1.bf16.msra.mxu0 %v1250
  %1883 = vmatprep.subr.bf16.mxu0 %v1255
  %1884 = vmatpush1.bf16.msra.mxu0 %v1254
  %1885 = vmatprep.subr.bf16.mxu0 %v1259
  %1886 = vmatpush1.bf16.msra.mxu0 %v1258
  %1887 = vmatprep.subr.bf16.mxu0 %v1263
  %1888 = vmatpush1.bf16.msra.mxu0 %v1262
  %1889 = vmatprep.subr.bf16.mxu0 %v1267
  %1890 = vmatpush1.bf16.msra.mxu0 %v1266
  %1891 = vmatprep.subr.bf16.mxu0 %v1271
  %1892 = vmatpush1.bf16.msra.mxu0 %v1270
  %1893 = vmatprep.mubr.bf16.mxu0 %v366
  %1894 = vmatmul.mubr.bf16.gmra.mrb[0].mxu0 %v364
  %v1895 = vpop.f32.mrb[0].mxu0
  %v1896 = vadd.f32 %v1855, %v1895
  %v1897 = vpop.f32.mrb[0].mxu0
  %v1898 = vadd.f32 %v1857, %v1897
  %v1899 = vpop.f32.mrb[0].mxu0
  %v1900 = vpop.f32.mrb[0].mxu0
  %1901 = vdwg.mxu0
  %1902 = vmatprep.subr.bf16.mxu0 %v1275
  %1903 = vmatpush1.bf16.msra.mxu0 %v1274
  %1904 = vmatprep.subr.bf16.mxu0 %v1279
  %1905 = vmatpush1.bf16.msra.mxu0 %v1278
  %1906 = vmatprep.subr.bf16.mxu0 %v1283
  %1907 = vmatpush1.bf16.msra.mxu0 %v1282
  %1908 = vmatprep.subr.bf16.mxu0 %v1287
  %1909 = vmatpush1.bf16.msra.mxu0 %v1286
  %1910 = vmatprep.subr.bf16.mxu0 %v1291
  %1911 = vmatpush1.bf16.msra.mxu0 %v1290
  %1912 = vmatprep.subr.bf16.mxu0 %v1295
  %1913 = vmatpush1.bf16.msra.mxu0 %v1294
  %1914 = vmatprep.subr.bf16.mxu0 %v1299
  %1915 = vmatpush1.bf16.msra.mxu0 %v1298
  %1916 = vmatprep.subr.bf16.mxu0 %v1303
  %1917 = vmatpush1.bf16.msra.mxu0 %v1302
  %1918 = vmatprep.subr.bf16.mxu0 %v1307
  %1919 = vmatpush1.bf16.msra.mxu0 %v1306
  %1920 = vmatprep.subr.bf16.mxu0 %v1311
  %1921 = vmatpush1.bf16.msra.mxu0 %v1310
  %1922 = vmatprep.subr.bf16.mxu0 %v1315
  %1923 = vmatpush1.bf16.msra.mxu0 %v1314
  %1924 = vmatprep.subr.bf16.mxu0 %v1319
  %1925 = vmatpush1.bf16.msra.mxu0 %v1318
  %1926 = vmatprep.subr.bf16.mxu0 %v1323
  %1927 = vmatpush1.bf16.msra.mxu0 %v1322
  %1928 = vmatprep.subr.bf16.mxu0 %v1327
  %1929 = vmatpush1.bf16.msra.mxu0 %v1326
  %1930 = vmatprep.subr.bf16.mxu0 %v1331
  %1931 = vmatpush1.bf16.msra.mxu0 %v1330
  %1932 = vmatprep.subr.bf16.mxu0 %v1335
  %1933 = vmatpush1.bf16.msra.mxu0 %v1334
  %1934 = vmatprep.mubr.bf16.mxu0 %v363
  %1935 = vmatmul.mubr.bf16.gmra.mrb[0].mxu0 %v349
  %v1936 = vpop.f32.mrb[0].mxu0
  %v1937 = vadd.f32 %v1896, %v1936
  %v1938 = vpop.f32.mrb[0].mxu0
  %v1939 = vadd.f32 %v1898, %v1938
  %v1940 = vpop.f32.mrb[0].mxu0
  %v1941 = vpop.f32.mrb[0].mxu0
  %1942 = vdwg.mxu0
  %1943 = vmatprep.subr.bf16.mxu0 %v1339
  %1944 = vmatpush1.bf16.msra.mxu0 %v1338
  %1945 = vmatprep.subr.bf16.mxu0 %v1343
  %1946 = vmatpush1.bf16.msra.mxu0 %v1342
  %1947 = vmatprep.subr.bf16.mxu0 %v1347
  %1948 = vmatpush1.bf16.msra.mxu0 %v1346
  %1949 = vmatprep.subr.bf16.mxu0 %v1351
  %1950 = vmatpush1.bf16.msra.mxu0 %v1350
  %1951 = vmatprep.subr.bf16.mxu0 %v1355
  %1952 = vmatpush1.bf16.msra.mxu0 %v1354
  %1953 = vmatprep.subr.bf16.mxu0 %v1359
  %1954 = vmatpush1.bf16.msra.mxu0 %v1358
  %1955 = vmatprep.subr.bf16.mxu0 %v1363
  %1956 = vmatpush1.bf16.msra.mxu0 %v1362
  %1957 = vmatprep.subr.bf16.mxu0 %v1367
  %1958 = vmatpush1.bf16.msra.mxu0 %v1366
  %1959 = vmatprep.subr.bf16.mxu0 %v1371
  %1960 = vmatpush1.bf16.msra.mxu0 %v1370
  %1961 = vmatprep.subr.bf16.mxu0 %v1375
  %1962 = vmatpush1.bf16.msra.mxu0 %v1374
  %1963 = vmatprep.subr.bf16.mxu0 %v1379
  %1964 = vmatpush1.bf16.msra.mxu0 %v1378
  %1965 = vmatprep.subr.bf16.mxu0 %v1383
  %1966 = vmatpush1.bf16.msra.mxu0 %v1382
  %1967 = vmatprep.subr.bf16.mxu0 %v1387
  %1968 = vmatpush1.bf16.msra.mxu0 %v1386
  %1969 = vmatprep.subr.bf16.mxu0 %v1391
  %1970 = vmatpush1.bf16.msra.mxu0 %v1390
  %1971 = vmatprep.subr.bf16.mxu0 %v1395
  %1972 = vmatpush1.bf16.msra.mxu0 %v1394
  %1973 = vmatprep.subr.bf16.mxu0 %v1399
  %1974 = vmatpush1.bf16.msra.mxu0 %v1398
  %1975 = vmatprep.mubr.bf16.mxu0 %v367
  %1976 = vmatmul.mubr.bf16.gmra.mrb[0].mxu0 %v365
  %v1977 = vpop.f32.mrb[0].mxu0
  %v1978 = vadd.f32 %v1937, %v1977
  %v1979 = vpop.f32.mrb[0].mxu0
  %v1980 = vadd.f32 %v1939, %v1979
  %v1981 = vpop.f32.mrb[0].mxu0
  %v1982 = vpop.f32.mrb[0].mxu0
  %1983 = vdwg.mxu0
  %vm1984 = vcmp.gt.f32.partialorder %v1814, 0.0
  %vm1985 = vcmp.gt.f32.partialorder %v1816, 0.0
  %vm1986 = vcmp.gt.f32.partialorder %v1978, 0.0
  %vm1987 = vcmp.gt.f32.partialorder %v1980, 0.0
  %v1988 = vmin.f32 %v1814, 0.0
  %v1989 = vmin.f32 %v1816, 0.0
  %v1990 = vmin.f32 %v1978, 0.0
  %v1991 = vmin.f32 %v1980, 0.0
  %v1992 = vmul.f32 %v1988, 1.442695
  %v1993 = vpow.pop %v1992
  %v1994 = vmul.f32 %v1989, 1.442695
  %v1995 = vpow.pop %v1994
  %v1996 = vmul.f32 %v1990, 1.442695
  %v1997 = vpow.pop %v1996
  %v1998 = vmul.f32 %v1991, 1.442695
  %v1999 = vpow.pop %v1998
  %v2000 = vsub.f32 %v1993, 1.0
  %v2001 = vsub.f32 %v1995, 1.0
  %v2002 = vsub.f32 %v1997, 1.0
  %v2003 = vsub.f32 %v1999, 1.0
  %v2004 = vsel %vm1984, %v1814, %v2000
  %v2005 = vsel %vm1985, %v1816, %v2001
  %v2006 = vsel %vm1986, %v1978, %v2002
  %v2007 = vsel %vm1987, %v1980, %v2003
  %v2008 = vld [vmem:[%s3] sm:$0xf]
  %v2010 = vlaneseq
  %v2011 = vshrl.u32 %v2010, 7
  %v2012 = vsub.s32 0, %v2011
  %v2013 = vrot.slane %v2008, %v2012
  %v2014 = vlaneseq
  %v2015 = vshrl.u32 %v2014, 7
  %v2016 = vsub.s32 1, %v2015
  %v2017 = vrot.slane %v2008, %v2016
  %v2018 = vlaneseq
  %v2019 = vshrl.u32 %v2018, 7
  %v2020 = vsub.s32 2, %v2019
  %v2021 = vrot.slane %v2008, %v2020
  %v2022 = vlaneseq
  %v2023 = vshrl.u32 %v2022, 7
  %v2024 = vsub.s32 3, %v2023
  %v2025 = vrot.slane %v2008, %v2024
  %v2030 = vmul.f32 %v2004, %v2013
  %v2031 = vmul.f32 %v2005, %v2017
  %v2032 = vmul.f32 %v2006, %v2021
  %v2033 = vmul.f32 %v2007, %v2025
  %v2034 = vld [vmem:[%s4] sm:$0xf]
  %v2036 = vlaneseq
  %v2037 = vshrl.u32 %v2036, 7
  %v2038 = vsub.s32 0, %v2037
  %v2039 = vrot.slane %v2034, %v2038
  %v2040 = vlaneseq
  %v2041 = vshrl.u32 %v2040, 7
  %v2042 = vsub.s32 1, %v2041
  %v2043 = vrot.slane %v2034, %v2042
  %v2044 = vlaneseq
  %v2045 = vshrl.u32 %v2044, 7
  %v2046 = vsub.s32 2, %v2045
  %v2047 = vrot.slane %v2034, %v2046
  %v2048 = vlaneseq
  %v2049 = vshrl.u32 %v2048, 7
  %v2050 = vsub.s32 3, %v2049
  %v2051 = vrot.slane %v2034, %v2050
  %v2056 = vadd.f32 %v2030, %v2039
  %v2057 = vadd.f32 %v2031, %v2043
  %v2058 = vadd.f32 %v2032, %v2047
  %v2059 = vadd.f32 %v2033, %v2051
  %v2060 = vpack.c.bf16 %v2056, %v2056
  %v2061 = vpack.c.bf16 %v2057, %v2057
  %v2062 = vpack.c.bf16 %v2058, %v2058
  %v2063 = vpack.c.bf16 %v2059, %v2059
  %v2064 = vld [vmem:[%s5] sm:$0xf]
  %v2065 = vld [vmem:[%s5 + $0x4] sm:$0xf]
  %v2066 = vld [vmem:[%s5 + $0x8] sm:$0xf]
  %v2067 = vld [vmem:[%s5 + $0xc] sm:$0xf]
  %v2068 = vld [vmem:[%s5 + $0x10] sm:$0xf]
  %v2069 = vld [vmem:[%s5 + $0x14] sm:$0xf]
  %v2070 = vld [vmem:[%s5 + $0x18] sm:$0xf]
  %v2071 = vld [vmem:[%s5 + $0x1c] sm:$0xf]
  %v2072 = vld [vmem:[%s5 + $0x20] sm:$0xf]
  %v2073 = vld [vmem:[%s5 + $0x24] sm:$0xf]
  %v2074 = vld [vmem:[%s5 + $0x28] sm:$0xf]
  %v2075 = vld [vmem:[%s5 + $0x2c] sm:$0xf]
  %v2076 = vld [vmem:[%s5 + $0x30] sm:$0xf]
  %v2077 = vld [vmem:[%s5 + $0x34] sm:$0xf]
  %v2078 = vld [vmem:[%s5 + $0x38] sm:$0xf]
  %v2079 = vld [vmem:[%s5 + $0x3c] sm:$0xf]
  %v2080 = vld [vmem:[%s5 + $0x40] sm:$0xf]
  %v2081 = vld [vmem:[%s5 + $0x44] sm:$0xf]
  %v2082 = vld [vmem:[%s5 + $0x48] sm:$0xf]
  %v2083 = vld [vmem:[%s5 + $0x4c] sm:$0xf]
  %v2084 = vld [vmem:[%s5 + $0x50] sm:$0xf]
  %v2085 = vld [vmem:[%s5 + $0x54] sm:$0xf]
  %v2086 = vld [vmem:[%s5 + $0x58] sm:$0xf]
  %v2087 = vld [vmem:[%s5 + $0x5c] sm:$0xf]
  %v2088 = vld [vmem:[%s5 + $0x60] sm:$0xf]
  %v2089 = vld [vmem:[%s5 + $0x64] sm:$0xf]
  %v2090 = vld [vmem:[%s5 + $0x68] sm:$0xf]
  %v2091 = vld [vmem:[%s5 + $0x6c] sm:$0xf]
  %v2092 = vld [vmem:[%s5 + $0x70] sm:$0xf]
  %v2093 = vld [vmem:[%s5 + $0x74] sm:$0xf]
  %v2094 = vld [vmem:[%s5 + $0x78] sm:$0xf]
  %v2095 = vld [vmem:[%s5 + $0x7c] sm:$0xf]
  %v2096 = vld [vmem:[%s5 + $0x80] sm:$0xf]
  %v2097 = vld [vmem:[%s5 + $0x84] sm:$0xf]
  %v2098 = vld [vmem:[%s5 + $0x88] sm:$0xf]
  %v2099 = vld [vmem:[%s5 + $0x8c] sm:$0xf]
  %v2100 = vld [vmem:[%s5 + $0x90] sm:$0xf]
  %v2101 = vld [vmem:[%s5 + $0x94] sm:$0xf]
  %v2102 = vld [vmem:[%s5 + $0x98] sm:$0xf]
  %v2103 = vld [vmem:[%s5 + $0x9c] sm:$0xf]
  %v2104 = vld [vmem:[%s5 + $0xa0] sm:$0xf]
  %v2105 = vld [vmem:[%s5 + $0xa4] sm:$0xf]
  %v2106 = vld [vmem:[%s5 + $0xa8] sm:$0xf]
  %v2107 = vld [vmem:[%s5 + $0xac] sm:$0xf]
  %v2108 = vld [vmem:[%s5 + $0xb0] sm:$0xf]
  %v2109 = vld [vmem:[%s5 + $0xb4] sm:$0xf]
  %v2110 = vld [vmem:[%s5 + $0xb8] sm:$0xf]
  %v2111 = vld [vmem:[%s5 + $0xbc] sm:$0xf]
  %v2112 = vld [vmem:[%s5 + $0xc0] sm:$0xf]
  %v2113 = vld [vmem:[%s5 + $0xc4] sm:$0xf]
  %v2114 = vld [vmem:[%s5 + $0xc8] sm:$0xf]
  %v2115 = vld [vmem:[%s5 + $0xcc] sm:$0xf]
  %v2116 = vld [vmem:[%s5 + $0xd0] sm:$0xf]
  %v2117 = vld [vmem:[%s5 + $0xd4] sm:$0xf]
  %v2118 = vld [vmem:[%s5 + $0xd8] sm:$0xf]
  %v2119 = vld [vmem:[%s5 + $0xdc] sm:$0xf]
  %v2120 = vld [vmem:[%s5 + $0xe0] sm:$0xf]
  %v2121 = vld [vmem:[%s5 + $0xe4] sm:$0xf]
  %v2122 = vld [vmem:[%s5 + $0xe8] sm:$0xf]
  %v2123 = vld [vmem:[%s5 + $0xec] sm:$0xf]
  %v2124 = vld [vmem:[%s5 + $0xf0] sm:$0xf]
  %v2125 = vld [vmem:[%s5 + $0xf4] sm:$0xf]
  %v2126 = vld [vmem:[%s5 + $0xf8] sm:$0xf]
  %v2127 = vld [vmem:[%s5 + $0xfc] sm:$0xf]
  %v2128 = vld [vmem:[%s6] sm:$0x1]
  %v2130 = vlaneseq
  %v2131 = vshrl.u32 %v2130, 7
  %v2132 = vsub.s32 0, %v2131
  %v2133 = vrot.slane %v2128, %v2132
  %v2199 = vunpack.c.l.b16 %v2064
  %v2200 = vunpack.c.l.b16 %v2065
  %v2201 = vunpack.c.l.b16 %v2066
  %v2202 = vunpack.c.l.b16 %v2067
  %v2203 = vunpack.c.l.b16 %v2068
  %v2204 = vunpack.c.l.b16 %v2069
  %v2205 = vunpack.c.l.b16 %v2070
  %v2206 = vunpack.c.l.b16 %v2071
  %v2207 = vunpack.c.l.b16 %v2072
  %v2208 = vunpack.c.l.b16 %v2073
  %v2209 = vunpack.c.l.b16 %v2074
  %v2210 = vunpack.c.l.b16 %v2075
  %v2211 = vunpack.c.l.b16 %v2076
  %v2212 = vunpack.c.l.b16 %v2077
  %v2213 = vunpack.c.l.b16 %v2078
  %v2214 = vunpack.c.l.b16 %v2079
  %v2215 = vunpack.c.l.b16 %v2080
  %v2216 = vunpack.c.l.b16 %v2081
  %v2217 = vunpack.c.l.b16 %v2082
  %v2218 = vunpack.c.l.b16 %v2083
  %v2219 = vunpack.c.l.b16 %v2084
  %v2220 = vunpack.c.l.b16 %v2085
  %v2221 = vunpack.c.l.b16 %v2086
  %v2222 = vunpack.c.l.b16 %v2087
  %v2223 = vunpack.c.l.b16 %v2088
  %v2224 = vunpack.c.l.b16 %v2089
  %v2225 = vunpack.c.l.b16 %v2090
  %v2226 = vunpack.c.l.b16 %v2091
  %v2227 = vunpack.c.l.b16 %v2092
  %v2228 = vunpack.c.l.b16 %v2093
  %v2229 = vunpack.c.l.b16 %v2094
  %v2230 = vunpack.c.l.b16 %v2095
  %v2231 = vunpack.c.l.b16 %v2096
  %v2232 = vunpack.c.l.b16 %v2097
  %v2233 = vunpack.c.l.b16 %v2098
  %v2234 = vunpack.c.l.b16 %v2099
  %v2235 = vunpack.c.l.b16 %v2100
  %v2236 = vunpack.c.l.b16 %v2101
  %v2237 = vunpack.c.l.b16 %v2102
  %v2238 = vunpack.c.l.b16 %v2103
  %v2239 = vunpack.c.l.b16 %v2104
  %v2240 = vunpack.c.l.b16 %v2105
  %v2241 = vunpack.c.l.b16 %v2106
  %v2242 = vunpack.c.l.b16 %v2107
  %v2243 = vunpack.c.l.b16 %v2108
  %v2244 = vunpack.c.l.b16 %v2109
  %v2245 = vunpack.c.l.b16 %v2110
  %v2246 = vunpack.c.l.b16 %v2111
  %v2247 = vunpack.c.l.b16 %v2112
  %v2248 = vunpack.c.l.b16 %v2113
  %v2249 = vunpack.c.l.b16 %v2114
  %v2250 = vunpack.c.l.b16 %v2115
  %v2251 = vunpack.c.l.b16 %v2116
  %v2252 = vunpack.c.l.b16 %v2117
  %v2253 = vunpack.c.l.b16 %v2118
  %v2254 = vunpack.c.l.b16 %v2119
  %v2255 = vunpack.c.l.b16 %v2120
  %v2256 = vunpack.c.l.b16 %v2121
  %v2257 = vunpack.c.l.b16 %v2122
  %v2258 = vunpack.c.l.b16 %v2123
  %v2259 = vunpack.c.l.b16 %v2124
  %v2260 = vunpack.c.l.b16 %v2125
  %v2261 = vunpack.c.l.b16 %v2126
  %v2262 = vunpack.c.l.b16 %v2127
  %v2263 = vpack.c.b16 %v2200, %v2199
  %v2264 = vpack.c.b16 %v2202, %v2201
  %v2265 = vpack.c.b16 %v2204, %v2203
  %v2266 = vpack.c.b16 %v2206, %v2205
  %v2267 = vpack.c.b16 %v2208, %v2207
  %v2268 = vpack.c.b16 %v2210, %v2209
  %v2269 = vpack.c.b16 %v2212, %v2211
  %v2270 = vpack.c.b16 %v2214, %v2213
  %v2271 = vpack.c.b16 %v2216, %v2215
  %v2272 = vpack.c.b16 %v2218, %v2217
  %v2273 = vpack.c.b16 %v2220, %v2219
  %v2274 = vpack.c.b16 %v2222, %v2221
  %v2275 = vpack.c.b16 %v2224, %v2223
  %v2276 = vpack.c.b16 %v2226, %v2225
  %v2277 = vpack.c.b16 %v2228, %v2227
  %v2278 = vpack.c.b16 %v2230, %v2229
  %v2279 = vpack.c.b16 %v2232, %v2231
  %v2280 = vpack.c.b16 %v2234, %v2233
  %v2281 = vpack.c.b16 %v2236, %v2235
  %v2282 = vpack.c.b16 %v2238, %v2237
  %v2283 = vpack.c.b16 %v2240, %v2239
  %v2284 = vpack.c.b16 %v2242, %v2241
  %v2285 = vpack.c.b16 %v2244, %v2243
  %v2286 = vpack.c.b16 %v2246, %v2245
  %v2287 = vpack.c.b16 %v2248, %v2247
  %v2288 = vpack.c.b16 %v2250, %v2249
  %v2289 = vpack.c.b16 %v2252, %v2251
  %v2290 = vpack.c.b16 %v2254, %v2253
  %v2291 = vpack.c.b16 %v2256, %v2255
  %v2292 = vpack.c.b16 %v2258, %v2257
  %v2293 = vpack.c.b16 %v2260, %v2259
  %v2294 = vpack.c.b16 %v2262, %v2261
  %2327 = vmatprep.subr.bf16.mxu0 0
  %2328 = vmatpush1.bf16.msra.mxu0 %v2263
  %2329 = vmatprep.subr.bf16.mxu0 0
  %2330 = vmatpush1.bf16.msra.mxu0 %v2264
  %2331 = vmatprep.subr.bf16.mxu0 0
  %2332 = vmatpush1.bf16.msra.mxu0 %v2265
  %2333 = vmatprep.subr.bf16.mxu0 0
  %2334 = vmatpush1.bf16.msra.mxu0 %v2266
  %2335 = vmatprep.subr.bf16.mxu0 0
  %2336 = vmatpush1.bf16.msra.mxu0 %v2267
  %2337 = vmatprep.subr.bf16.mxu0 0
  %2338 = vmatpush1.bf16.msra.mxu0 %v2268
  %2339 = vmatprep.subr.bf16.mxu0 0
  %2340 = vmatpush1.bf16.msra.mxu0 %v2269
  %2341 = vmatprep.subr.bf16.mxu0 0
  %2342 = vmatpush1.bf16.msra.mxu0 %v2270
  %2343 = vmatprep.subr.bf16.mxu0 0
  %2344 = vmatpush1.bf16.msra.mxu0 %v2271
  %2345 = vmatprep.subr.bf16.mxu0 0
  %2346 = vmatpush1.bf16.msra.mxu0 %v2272
  %2347 = vmatprep.subr.bf16.mxu0 0
  %2348 = vmatpush1.bf16.msra.mxu0 %v2273
  %2349 = vmatprep.subr.bf16.mxu0 0
  %2350 = vmatpush1.bf16.msra.mxu0 %v2274
  %2351 = vmatprep.subr.bf16.mxu0 0
  %2352 = vmatpush1.bf16.msra.mxu0 %v2275
  %2353 = vmatprep.subr.bf16.mxu0 0
  %2354 = vmatpush1.bf16.msra.mxu0 %v2276
  %2355 = vmatprep.subr.bf16.mxu0 0
  %2356 = vmatpush1.bf16.msra.mxu0 %v2277
  %2357 = vmatprep.subr.bf16.mxu0 0
  %2358 = vmatpush1.bf16.msra.mxu0 %v2278
  %2359 = vmatprep.mubr.bf16.mxu0 %v2061
  %2360 = vmatmul.mubr.bf16.gmra.mrb[0].mxu0 %v2060
  %v2361 = vpop.f32.mrb[0].mxu0
  %v2362 = vadd.f32 %v2133, %v2361
  %v2363 = vpop.f32.mrb[0].mxu0
  %v2364 = vpop.f32.mrb[0].mxu0
  %v2365 = vpop.f32.mrb[0].mxu0
  %2366 = vdwg.mxu0
  %2367 = vmatprep.subr.bf16.mxu0 0
  %2368 = vmatpush1.bf16.msra.mxu0 %v2279
  %2369 = vmatprep.subr.bf16.mxu0 0
  %2370 = vmatpush1.bf16.msra.mxu0 %v2280
  %2371 = vmatprep.subr.bf16.mxu0 0
  %2372 = vmatpush1.bf16.msra.mxu0 %v2281
  %2373 = vmatprep.subr.bf16.mxu0 0
  %2374 = vmatpush1.bf16.msra.mxu0 %v2282
  %2375 = vmatprep.subr.bf16.mxu0 0
  %2376 = vmatpush1.bf16.msra.mxu0 %v2283
  %2377 = vmatprep.subr.bf16.mxu0 0
  %2378 = vmatpush1.bf16.msra.mxu0 %v2284
  %2379 = vmatprep.subr.bf16.mxu0 0
  %2380 = vmatpush1.bf16.msra.mxu0 %v2285
  %2381 = vmatprep.subr.bf16.mxu0 0
  %2382 = vmatpush1.bf16.msra.mxu0 %v2286
  %2383 = vmatprep.subr.bf16.mxu0 0
  %2384 = vmatpush1.bf16.msra.mxu0 %v2287
  %2385 = vmatprep.subr.bf16.mxu0 0
  %2386 = vmatpush1.bf16.msra.mxu0 %v2288
  %2387 = vmatprep.subr.bf16.mxu0 0
  %2388 = vmatpush1.bf16.msra.mxu0 %v2289
  %2389 = vmatprep.subr.bf16.mxu0 0
  %2390 = vmatpush1.bf16.msra.mxu0 %v2290
  %2391 = vmatprep.subr.bf16.mxu0 0
  %2392 = vmatpush1.bf16.msra.mxu0 %v2291
  %2393 = vmatprep.subr.bf16.mxu0 0
  %2394 = vmatpush1.bf16.msra.mxu0 %v2292
  %2395 = vmatprep.subr.bf16.mxu0 0
  %2396 = vmatpush1.bf16.msra.mxu0 %v2293
  %2397 = vmatprep.subr.bf16.mxu0 0
  %2398 = vmatpush1.bf16.msra.mxu0 %v2294
  %2399 = vmatprep.mubr.bf16.mxu0 %v2063
  %2400 = vmatmul.mubr.bf16.gmra.mrb[0].mxu0 %v2062
  %v2401 = vpop.f32.mrb[0].mxu0
  %v2402 = vadd.f32 %v2362, %v2401
  %v2403 = vpop.f32.mrb[0].mxu0
  %v2404 = vpop.f32.mrb[0].mxu0
  %v2405 = vpop.f32.mrb[0].mxu0
  %2406 = vdwg.mxu0
  %vm2407 = vcmp.gt.f32.partialorder %v2402, 0.0
  %v2408 = vmin.f32 %v2402, 0.0
  %v2409 = vmul.f32 %v2408, 1.442695
  %v2410 = vpow.pop %v2409
  %v2411 = vsub.f32 %v2410, 1.0
  %v2412 = vsel %vm2407, %v2402, %v2411
  %v2413 = vld [vmem:[%s7] sm:$0x1]
  %v2415 = vlaneseq
  %v2416 = vshrl.u32 %v2415, 7
  %v2417 = vsub.s32 0, %v2416
  %v2418 = vrot.slane %v2413, %v2417
  %v2420 = vmul.f32 %v2412, %v2418
  %v2421 = vld [vmem:[%s8] sm:$0x1]
  %v2423 = vlaneseq
  %v2424 = vshrl.u32 %v2423, 7
  %v2425 = vsub.s32 0, %v2424
  %v2426 = vrot.slane %v2421, %v2425
  %v2428 = vadd.f32 %v2420, %v2426
  %v2429 = vld [vmem:[%s9] sm:$0x3]
  %v2430 = vld [vmem:[%s9 + $0x2] sm:$0x3]
  %v2431 = vld [vmem:[%s9 + $0x4] sm:$0x3]
  %v2432 = vld [vmem:[%s9 + $0x6] sm:$0x3]
  %v2433 = vld [vmem:[%s9 + $0x8] sm:$0x3]
  %v2434 = vld [vmem:[%s9 + $0xa] sm:$0x3]
  %v2435 = vld [vmem:[%s9 + $0xc] sm:$0x3]
  %v2436 = vld [vmem:[%s9 + $0xe] sm:$0x3]
  %v2437 = vld [vmem:[%s9 + $0x10] sm:$0x3]
  %v2438 = vld [vmem:[%s9 + $0x12] sm:$0x3]
  %v2439 = vld [vmem:[%s9 + $0x14] sm:$0x3]
  %v2440 = vld [vmem:[%s9 + $0x16] sm:$0x3]
  %v2441 = vld [vmem:[%s9 + $0x18] sm:$0x3]
  %v2442 = vld [vmem:[%s9 + $0x1a] sm:$0x3]
  %v2443 = vld [vmem:[%s9 + $0x1c] sm:$0x3]
  %v2444 = vld [vmem:[%s9 + $0x1e] sm:$0x3]
  %v2445 = vld [vmem:[%s9 + $0x20] sm:$0x3]
  %v2446 = vld [vmem:[%s9 + $0x22] sm:$0x3]
  %v2447 = vld [vmem:[%s9 + $0x24] sm:$0x3]
  %v2448 = vld [vmem:[%s9 + $0x26] sm:$0x3]
  %v2449 = vld [vmem:[%s9 + $0x28] sm:$0x3]
  %v2450 = vld [vmem:[%s9 + $0x2a] sm:$0x3]
  %v2451 = vld [vmem:[%s9 + $0x2c] sm:$0x3]
  %v2452 = vld [vmem:[%s9 + $0x2e] sm:$0x3]
  %v2453 = vld [vmem:[%s9 + $0x30] sm:$0x3]
  %v2454 = vld [vmem:[%s9 + $0x32] sm:$0x3]
  %v2455 = vld [vmem:[%s9 + $0x34] sm:$0x3]
  %v2456 = vld [vmem:[%s9 + $0x36] sm:$0x3]
  %v2457 = vld [vmem:[%s9 + $0x38] sm:$0x3]
  %v2458 = vld [vmem:[%s9 + $0x3a] sm:$0x3]
  %v2459 = vld [vmem:[%s9 + $0x3c] sm:$0x3]
  %v2460 = vld [vmem:[%s9 + $0x3e] sm:$0x3]
  %v2461 = vld [vmem:[%s9 + $0x40] sm:$0x3]
  %v2462 = vld [vmem:[%s9 + $0x42] sm:$0x3]
  %v2463 = vld [vmem:[%s9 + $0x44] sm:$0x3]
  %v2464 = vld [vmem:[%s9 + $0x46] sm:$0x3]
  %v2465 = vld [vmem:[%s9 + $0x48] sm:$0x3]
  %v2466 = vld [vmem:[%s9 + $0x4a] sm:$0x3]
  %v2467 = vld [vmem:[%s9 + $0x4c] sm:$0x3]
  %v2468 = vld [vmem:[%s9 + $0x4e] sm:$0x3]
  %v2469 = vld [vmem:[%s9 + $0x50] sm:$0x3]
  %v2470 = vld [vmem:[%s9 + $0x52] sm:$0x3]
  %v2471 = vld [vmem:[%s9 + $0x54] sm:$0x3]
  %v2472 = vld [vmem:[%s9 + $0x56] sm:$0x3]
  %v2473 = vld [vmem:[%s9 + $0x58] sm:$0x3]
  %v2474 = vld [vmem:[%s9 + $0x5a] sm:$0x3]
  %v2475 = vld [vmem:[%s9 + $0x5c] sm:$0x3]
  %v2476 = vld [vmem:[%s9 + $0x5e] sm:$0x3]
  %v2477 = vld [vmem:[%s9 + $0x60] sm:$0x3]
  %vm2478 = vcmask 517120
  %v2479 = vsel %vm2478, %v2429, -inf
  %v2480 = vsel %vm2478, %v2430, -inf
  %v2481 = vsel %vm2478, %v2431, -inf
  %v2482 = vsel %vm2478, %v2432, -inf
  %v2483 = vsel %vm2478, %v2433, -inf
  %v2484 = vmax.f32 %v2479, %v2483
  %v2485 = vsel %vm2478, %v2434, -inf
  %v2486 = vmax.f32 %v2480, %v2485
  %v2487 = vsel %vm2478, %v2435, -inf
  %v2488 = vmax.f32 %v2481, %v2487
  %v2489 = vsel %vm2478, %v2436, -inf
  %v2490 = vmax.f32 %v2482, %v2489
  %v2491 = vsel %vm2478, %v2437, -inf
  %v2492 = vmax.f32 %v2484, %v2491
  %v2493 = vsel %vm2478, %v2438, -inf
  %v2494 = vmax.f32 %v2486, %v2493
  %v2495 = vsel %vm2478, %v2439, -inf
  %v2496 = vmax.f32 %v2488, %v2495
  %v2497 = vsel %vm2478, %v2440, -inf
  %v2498 = vmax.f32 %v2490, %v2497
  %v2499 = vsel %vm2478, %v2441, -inf
  %v2500 = vmax.f32 %v2492, %v2499
  %v2501 = vsel %vm2478, %v2442, -inf
  %v2502 = vmax.f32 %v2494, %v2501
  %v2503 = vsel %vm2478, %v2443, -inf
  %v2504 = vmax.f32 %v2496, %v2503
  %v2505 = vsel %vm2478, %v2444, -inf
  %v2506 = vmax.f32 %v2498, %v2505
  %v2507 = vsel %vm2478, %v2445, -inf
  %v2508 = vmax.f32 %v2500, %v2507
  %v2509 = vsel %vm2478, %v2446, -inf
  %v2510 = vmax.f32 %v2502, %v2509
  %v2511 = vsel %vm2478, %v2447, -inf
  %v2512 = vmax.f32 %v2504, %v2511
  %v2513 = vsel %vm2478, %v2448, -inf
  %v2514 = vmax.f32 %v2506, %v2513
  %v2515 = vsel %vm2478, %v2449, -inf
  %v2516 = vmax.f32 %v2508, %v2515
  %v2517 = vsel %vm2478, %v2450, -inf
  %v2518 = vmax.f32 %v2510, %v2517
  %v2519 = vsel %vm2478, %v2451, -inf
  %v2520 = vmax.f32 %v2512, %v2519
  %v2521 = vsel %vm2478, %v2452, -inf
  %v2522 = vmax.f32 %v2514, %v2521
  %v2523 = vsel %vm2478, %v2453, -inf
  %v2524 = vmax.f32 %v2516, %v2523
  %v2525 = vsel %vm2478, %v2454, -inf
  %v2526 = vmax.f32 %v2518, %v2525
  %v2527 = vsel %vm2478, %v2455, -inf
  %v2528 = vmax.f32 %v2520, %v2527
  %v2529 = vsel %vm2478, %v2456, -inf
  %v2530 = vmax.f32 %v2522, %v2529
  %v2531 = vsel %vm2478, %v2457, -inf
  %v2532 = vmax.f32 %v2524, %v2531
  %v2533 = vsel %vm2478, %v2458, -inf
  %v2534 = vmax.f32 %v2526, %v2533
  %v2535 = vsel %vm2478, %v2459, -inf
  %v2536 = vmax.f32 %v2528, %v2535
  %v2537 = vsel %vm2478, %v2460, -inf
  %v2538 = vmax.f32 %v2530, %v2537
  %v2539 = vsel %vm2478, %v2461, -inf
  %v2540 = vmax.f32 %v2532, %v2539
  %v2541 = vsel %vm2478, %v2462, -inf
  %v2542 = vmax.f32 %v2534, %v2541
  %v2543 = vsel %vm2478, %v2463, -inf
  %v2544 = vmax.f32 %v2536, %v2543
  %v2545 = vsel %vm2478, %v2464, -inf
  %v2546 = vmax.f32 %v2538, %v2545
  %v2547 = vsel %vm2478, %v2465, -inf
  %v2548 = vmax.f32 %v2540, %v2547
  %v2549 = vsel %vm2478, %v2466, -inf
  %v2550 = vmax.f32 %v2542, %v2549
  %v2551 = vsel %vm2478, %v2467, -inf
  %v2552 = vmax.f32 %v2544, %v2551
  %v2553 = vsel %vm2478, %v2468, -inf
  %v2554 = vmax.f32 %v2546, %v2553
  %v2555 = vsel %vm2478, %v2469, -inf
  %v2556 = vmax.f32 %v2548, %v2555
  %v2557 = vsel %vm2478, %v2470, -inf
  %v2558 = vmax.f32 %v2550, %v2557
  %v2559 = vsel %vm2478, %v2471, -inf
  %v2560 = vmax.f32 %v2552, %v2559
  %v2561 = vsel %vm2478, %v2472, -inf
  %v2562 = vmax.f32 %v2554, %v2561
  %v2563 = vsel %vm2478, %v2473, -inf
  %v2564 = vmax.f32 %v2556, %v2563
  %v2565 = vsel %vm2478, %v2474, -inf
  %v2566 = vmax.f32 %v2558, %v2565
  %v2567 = vsel %vm2478, %v2475, -inf
  %v2568 = vmax.f32 %v2560, %v2567
  %v2569 = vsel %vm2478, %v2476, -inf
  %v2570 = vmax.f32 %v2562, %v2569
  %v2571 = vsel %vm2478, %v2477, -inf
  %v2572 = vmax.f32 %v2564, %v2571
  %v2573 = vmax.f32 %v2572, %v2566
  %v2574 = vmax.f32 %v2568, %v2570
  %v2575 = vmax.f32 %v2573, %v2574
  %v2576 = vpack.c.bf16 %v2575, %v2575
  %v2577 = vld [vmem:[%s10] sm:$0xf]
  %v2578 = vld [vmem:[%s10 + $0x4] sm:$0xf]
  %v2579 = vld [vmem:[%s10 + $0x8] sm:$0xf]
  %v2580 = vld [vmem:[%s10 + $0xc] sm:$0xf]
  %v2581 = vld [vmem:[%s10 + $0x10] sm:$0xf]
  %v2582 = vld [vmem:[%s10 + $0x14] sm:$0xf]
  %v2583 = vld [vmem:[%s10 + $0x18] sm:$0xf]
  %v2584 = vld [vmem:[%s10 + $0x1c] sm:$0xf]
  %v2593 = vunpack.c.l.b16 %v2577
  %v2594 = vunpack.c.l.b16 %v2578
  %v2595 = vunpack.c.l.b16 %v2579
  %v2596 = vunpack.c.l.b16 %v2580
  %v2597 = vunpack.c.l.b16 %v2581
  %v2598 = vunpack.c.l.b16 %v2582
  %v2599 = vunpack.c.l.b16 %v2583
  %v2600 = vunpack.c.l.b16 %v2584
  %v2601 = vpack.c.b16 %v2594, %v2593
  %v2602 = vpack.c.b16 %v2596, %v2595
  %v2603 = vpack.c.b16 %v2598, %v2597
  %v2604 = vpack.c.b16 %v2600, %v2599
  %vm2609 = vcmask 523264
  %v2611 = vsel %vm2609, %v2576, 0
  %2613 = vmatprep.subr.bf16.mxu0 0
  %2614 = vmatpush1.bf16.msra.mxu0 %v2601
  %2615 = vmatprep.subr.bf16.mxu0 0
  %2616 = vmatpush1.bf16.msra.mxu0 %v2602
  %2617 = vmatprep.subr.bf16.mxu0 0
  %2618 = vmatpush1.bf16.msra.mxu0 %v2603
  %2619 = vmatprep.subr.bf16.mxu0 0
  %2620 = vmatpush1.bf16.msra.mxu0 %v2604
  %2621 = vmatprep.subr.bf16.mxu0 0
  %2622 = vmatpush1.bf16.msra.mxu0 0
  %2623 = vmatprep.subr.bf16.mxu0 0
  %2624 = vmatpush1.bf16.msra.mxu0 0
  %2625 = vmatprep.subr.bf16.mxu0 0
  %2626 = vmatpush1.bf16.msra.mxu0 0
  %2627 = vmatprep.subr.bf16.mxu0 0
  %2628 = vmatpush1.bf16.msra.mxu0 0
  %2629 = vmatprep.subr.bf16.mxu0 0
  %2630 = vmatpush1.bf16.msra.mxu0 0
  %2631 = vmatprep.subr.bf16.mxu0 0
  %2632 = vmatpush1.bf16.msra.mxu0 0
  %2633 = vmatprep.subr.bf16.mxu0 0
  %2634 = vmatpush1.bf16.msra.mxu0 0
  %2635 = vmatprep.subr.bf16.mxu0 0
  %2636 = vmatpush1.bf16.msra.mxu0 0
  %2637 = vmatprep.subr.bf16.mxu0 0
  %2638 = vmatpush1.bf16.msra.mxu0 0
  %2639 = vmatprep.subr.bf16.mxu0 0
  %2640 = vmatpush1.bf16.msra.mxu0 0
  %2641 = vmatprep.subr.bf16.mxu0 0
  %2642 = vmatpush1.bf16.msra.mxu0 0
  %2643 = vmatprep.subr.bf16.mxu0 0
  %2644 = vmatpush1.bf16.msra.mxu0 0
  %2645 = vmatprep.mubr.bf16.mxu0 0
  %2646 = vmatmul.mubr.bf16.gmra.mrb[0].mxu0 %v2611
  %v2647 = vpop.f32.mrb[0].mxu0
  %v2648 = vadd.f32 0.0, %v2647
  %v2649 = vpop.f32.mrb[0].mxu0
  %v2650 = vpop.f32.mrb[0].mxu0
  %v2651 = vpop.f32.mrb[0].mxu0
  %2652 = vdwg.mxu0
  %v2653 = vadd.f32 %v2428, %v2648
  %2654 = vst [vmem:[%s11] sm:$0x3] %v2653
  // Predicated region
  $region46: #{resblock_pallas.1} parent=0 // pred_check
    _
  $region47: #{resblock_pallas.1} parent=0 // pred_check_branch
    %2656 = sbr.rel (0) target = $region49
  $region48: #{resblock_pallas.1} parent=0 // pred_region
    _
  $region49: #{resblock_pallas.1} parent=0 // pred_fallthru
    _
  // Predicated region
  $region50: #{resblock_pallas.1} parent=0 // pred_check
    _
  $region51: #{resblock_pallas.1} parent=0 // pred_check_branch
    %2658 = sbr.rel (0) target = $region53
  $region52: #{resblock_pallas.1} parent=0 // pred_region
    _
  $region53: #{resblock_pallas.1} parent=0 // pred_fallthru
    _

</llo_original>
